<compile_context>
chip_gen: v5e
topology: v5e:2x2
jax: 0.10.0
libtpu: 0.0.40
codegen_flags: <defaults>
</compile_context>

<pallas_src>
import numpy as np
import jax
import jax.numpy as jnp
from jax import lax
from jax.experimental import pallas as pl
from jax.experimental.pallas import tpu as pltpu

_VMEM = pl.BlockSpec(memory_space=pltpu.MemorySpace.VMEM)
_BN_EPS = 1e-5


# ------------------------------------------------------------------ init-time packing helpers
# (pure numpy, executed once at model construction — NOT per forward)

def _round_up(x, m):
    return -(-x // m) * m


def _conv2d_dense(w_oihw, b, H, W, stride, padding):
    """Exact dense matrix of nn.Conv2d acting on (H,W,C)-flat vectors (NHWC layout)."""
    w = np.asarray(w_oihw, np.float32)
    b = np.asarray(b, np.float32)
    OC, IC, KH, KW = w.shape
    OH = (H + 2 * padding - KH) // stride + 1
    OW = (W + 2 * padding - KW) // stride + 1
    dense = np.zeros((H * W * IC, OH * OW * OC), np.float32)
    for oh in range(OH):
        for ow in range(OW):
            col = (oh * OW + ow) * OC
            for kh in range(KH):
                ih = stride * oh + kh - padding
                if ih < 0 or ih >= H:
                    continue
                for kw in range(KW):
                    iw = stride * ow + kw - padding
                    if iw < 0 or iw >= W:
                        continue
                    row = (ih * W + iw) * IC
                    dense[row:row + IC, col:col + OC] += w[:, :, kh, kw].T
    brow = np.tile(b, OH * OW)          # (OH*OW*OC,), channel-fastest (h,w,c)
    return dense, brow


def _convt2d_dense(w_iohw, b, Hin, Win, stride, padding):
    """Exact dense matrix of nn.ConvTranspose2d acting on (H,W,C)-flat vectors."""
    w = np.asarray(w_iohw, np.float32)
    b = np.asarray(b, np.float32)
    IC, OC, KH, KW = w.shape
    Hout = (Hin - 1) * stride - 2 * padding + KH
    Wout = (Win - 1) * stride - 2 * padding + KW
    dense = np.zeros((Hin * Win * IC, Hout * Wout * OC), np.float32)
    for ih in range(Hin):
        for iw in range(Win):
            row = (ih * Win + iw) * IC
            for kh in range(KH):
                oh = stride * ih + kh - padding
                if oh < 0 or oh >= Hout:
                    continue
                for kw in range(KW):
                    ow = stride * iw + kw - padding
                    if ow < 0 or ow >= Wout:
                        continue
                    col = (oh * Wout + ow) * OC
                    dense[row:row + IC, col:col + OC] += w[:, :, kh, kw]
    brow = np.tile(b, Hout * Wout)
    return dense, brow


def _chan_indicator(hw, c):
    """(hw*c, c) 0/1 matrix: column k selects features j with j % c == k (NHWC channel)."""
    m = np.zeros((hw * c, c), np.float32)
    m[np.arange(hw * c), np.arange(hw * c) % c] = 1.0
    return m


def _chw_to_hwc_perm(C, H, W):
    """perm[j_hwc] = j_chw, so x_hwc = x_chw[perm]."""
    idx = np.arange(C * H * W).reshape(C, H, W)
    return np.transpose(idx, (1, 2, 0)).reshape(-1)


def _pack_rows(entries):
    """Stack (N,)-vectors into one f32 slab; each row starts on its own 8-sublane group."""
    width = _round_up(max(np.asarray(v).size for _, v in entries), 128)
    offs = {}
    slab = np.zeros((8 * len(entries), width), np.float32)
    for i, (name, v) in enumerate(entries):
        v = np.asarray(v, np.float32).reshape(-1)
        slab[8 * i, :v.size] = v
        offs[name] = (8 * i, int(v.size))
    return slab, offs


def _pack_mats(entries, align=16):
    """Stack small 2-D weights into one slab; row offsets aligned to the bf16 (16,128) tile."""
    width = _round_up(max(np.asarray(m).shape[1] for _, m in entries), 128)
    offs, total = {}, 0
    for name, m in entries:
        m = np.asarray(m)
        offs[name] = (total, int(m.shape[0]), int(m.shape[1]))
        total += _round_up(m.shape[0], align)
    slab = np.zeros((_round_up(total, align), width), np.float32)
    for name, m in entries:
        off, r, c = offs[name]
        slab[off:off + r, :c] = np.asarray(m, np.float32)
    return slab, offs


def _init(key, shape, scale=0.1):
    return scale * jax.random.normal(key, shape, dtype=jnp.float32)


# ------------------------------------------------------------------ CCVAE model

class CCVAEPallas:
    def __init__(self, params, key):
        self.latent_dims = params["latent_dims"]
        self.c = params["capacity"]
        self.input_size = params["input_size"]
        self.distribution_std = params["distribution_std"]
        self.is_sigmoid = params["sigmoid"]
        self.latent_portion = params["latent_portion"]
        self.training = True
        k = 4
        self.dim_1 = (self.input_size - k + 2) // 2 + 1
        self.dim_2 = (self.dim_1 - k + 2) // 2 + 1
        self.rec_dim = int(self.latent_dims * (1 - self.latent_portion))
        self.burn_dim = int(self.latent_dims * self.latent_portion)
        c, L, d2 = self.c, self.latent_dims, self.dim_2
        # The torch module implicitly requires latent_dims == 2*capacity for shapes to line up.
        assert L == 2 * c, "CCVAE requires latent_dims == 2 * capacity"
        feat = L * d2 * d2
        keys = jax.random.split(key, 20)
        self.conv1_w = _init(keys[0], (c, 4, k, k));         self.conv1_b = _init(keys[1], (c,))
        self.conv2_w = _init(keys[2], (2 * c, c, k, k));     self.conv2_b = _init(keys[3], (2 * c,))
        self.bn1_g = jnp.ones((c,), jnp.float32);   self.bn1_b = jnp.zeros((c,), jnp.float32)
        self.bn2_g = jnp.ones((2 * c,), jnp.float32); self.bn2_b = jnp.zeros((2 * c,), jnp.float32)
        self.fc_mu_w = _init(keys[4], (feat, L));   self.fc_mu_b = _init(keys[5], (L,))
        self.fc_logvar_w = _init(keys[6], (feat, L)); self.fc_logvar_b = _init(keys[7], (L,))
        self.fc_w = _init(keys[8], (L, feat));      self.fc_b = _init(keys[9], (feat,))
        self.convt1_w = _init(keys[10], (2 * c, c, k, k)); self.convt1_b = _init(keys[11], (c,))
        self.convt2_w = _init(keys[12], (c, 1, k, k));     self.convt2_b = _init(keys[13], (1,))
        self.bn1_2_g = jnp.ones((c,), jnp.float32); self.bn1_2_b = jnp.zeros((c,), jnp.float32)
        self.fc_r1_w = _init(keys[14], (self.burn_dim, 128)); self.fc_r1_b = _init(keys[15], (128,))
        self.bn_r1_g = jnp.ones((128,), jnp.float32); self.bn_r1_b = jnp.zeros((128,), jnp.float32)
        self.fc_r2_w = _init(keys[16], (128, 64));  self.fc_r2_b = _init(keys[17], (64,))
        self.bn_r2_g = jnp.ones((64,), jnp.float32); self.bn_r2_b = jnp.zeros((64,), jnp.float32)
        self.fc_r4_w = _init(keys[18], (64, 1));    self.fc_r4_b = _init(keys[19], (1,))

        self._pack_params()
        self._fwd = self._build_forward()

    # ---------- pack all weights into the kernel-ready layout (once)
    def _pack_params(self):
        c, L, d1, d2, S = self.c, self.latent_dims, self.dim_1, self.dim_2, self.input_size
        pw = 128 - 2 * L                               # predictor tail width in the small-out slab
        w1d, b1row = _conv2d_dense(self.conv1_w, self.conv1_b, S, S, 2, 1)
        w2d, b2row = _conv2d_dense(self.conv2_w, self.conv2_b, d1, d1, 2, 1)
        wt1d, bt1row = _convt2d_dense(self.convt1_w, self.convt1_b, d2, d2, 2, 1)
        wt2d, bt2row = _convt2d_dense(self.convt2_w, self.convt2_b, d1, d1, 2, 1)
        ind1 = _chan_indicator(d1 * d1, c)
        ind2 = _chan_indicator(d2 * d2, 2 * c)
        # torch flattens/unflattens in (C,H,W) order; kernel features are (H,W,C)-flat,
        # so permute the FC weights that touch the flattened conv features accordingly.
        perm = _chw_to_hwc_perm(2 * c, d2, d2)
        wmulv = np.concatenate([np.asarray(self.fc_mu_w)[perm, :],
                                np.asarray(self.fc_logvar_w)[perm, :]], axis=1)   # (feat, 2L)
        bmulv = np.concatenate([np.asarray(self.fc_mu_b), np.asarray(self.fc_logvar_b)])
        wfc = np.asarray(self.fc_w)[:, perm]
        bfc = np.asarray(self.fc_b)[perm]
        # z[:, rec_dim:] slice folded into a zero-padded fc_r1 weight (exact).
        wr1 = np.zeros((L, 128), np.float32)
        wr1[self.rec_dim:, :] = np.asarray(self.fc_r1_w)
        # fc_r4 widened to the (128-2L)-wide tail of the small-out slab; real output = column 0.
        wr4 = np.zeros((64, pw), np.float32); wr4[:, 0] = np.asarray(self.fc_r4_w)[:, 0]
        br4 = np.zeros((pw,), np.float32);    br4[0] = float(np.asarray(self.fc_r4_b)[0])

        rows_slab, self._row_offs = _pack_rows([
            ("b1", b1row), ("g1", self.bn1_g), ("be1", self.bn1_b),
            ("b2", b2row), ("g2", self.bn2_g), ("be2", self.bn2_b),
            ("bmulv", bmulv), ("bfc", bfc),
            ("bt1", bt1row), ("g12", self.bn1_2_g), ("be12", self.bn1_2_b),
            ("bt2", bt2row),
            ("br1", self.fc_r1_b), ("gr1", self.bn_r1_g), ("ber1", self.bn_r1_b),
            ("br2", self.fc_r2_b), ("gr2", self.bn_r2_g), ("ber2", self.bn_r2_b),
            ("br4", br4),
        ])
        ws_slab, self._ws_offs = _pack_mats([
            ("wmulv", wmulv), ("wfc", wfc), ("wr1", wr1),
            ("wr2", np.asarray(self.fc_r2_w)), ("wr4", wr4),
            ("ind1", ind1), ("ind1t", ind1.T), ("ind2", ind2), ("ind2t", ind2.T),
        ])

        bf16 = lambda m: jnp.asarray(m, jnp.bfloat16)   # MXU operands; accumulation stays f32
        self._rows = jnp.asarray(rows_slab, jnp.float32)
        self._ws = bf16(ws_slab)
        self._w1, self._w2 = bf16(w1d), bf16(w2d)
        self._wt1, self._wt2 = bf16(wt1d), bf16(wt2d)

    # ---------- build the jitted forward (single fused pallas_call + boundary layout glue)
    def _build_forward(self):
        training, sigmoid_out = self.training, self.is_sigmoid
        S, L, c, d1, d2 = self.input_size, self.latent_dims, self.c, self.dim_1, self.dim_2
        dist_std = float(self.distribution_std)
        N1, N2 = d1 * d1 * c, d2 * d2 * 2 * c
        pw = 128 - 2 * L
        row_offs, ws_offs = self._row_offs, self._ws_offs
        # aux slab column layout (per-batch randomness / masking, all lane-aligned blocks)
        o_d1, o_d2, o_d3 = 0, N1, N1 + N2
        o_eps = _round_up(o_d3 + N1, 128)
        o_msk = o_eps + 128
        aux_w = o_msk + 128

        def fwd(x_nchw, key, rows, w1, w2, wt1, wt2, ws):
            B = x_nchw.shape[0]
            Bp = max(8, _round_up(B, 8))                                    # sublane-align batch
            x_flat = jnp.transpose(x_nchw, (0, 2, 3, 1)).reshape(B, -1).astype(jnp.float32)
            x_flat = jnp.pad(x_flat, ((0, Bp - B), (0, 0)))

            # ---- per-batch aux slab: dropout keep-masks (0 / 2), reparam noise, real-row mask
            k1, k2, k3, k4 = jax.random.split(key, 4)
            if training:
                dm1 = jax.random.bernoulli(k1, 0.5, (Bp, N1)).astype(jnp.float32) * 2.0
                dm2 = jax.random.bernoulli(k2, 0.5, (Bp, N2)).astype(jnp.float32) * 2.0
                dm3 = jax.random.bernoulli(k3, 0.5, (Bp, N1)).astype(jnp.float32) * 2.0
                eps = dist_std * jax.random.normal(k4, (Bp, L), dtype=jnp.float32)
            else:
                dm1 = jnp.ones((Bp, N1), jnp.float32)
                dm2 = jnp.ones((Bp, N2), jnp.float32)
                dm3 = jnp.ones((Bp, N1), jnp.float32)
                eps = jnp.zeros((Bp, L), jnp.float32)
            bmask = (jnp.arange(Bp) < B).astype(jnp.float32)[:, None]
            aux = jnp.zeros((Bp, aux_w), jnp.float32)
            aux = aux.at[:, o_d1:o_d1 + N1].set(dm1)
            aux = aux.at[:, o_d2:o_d2 + N2].set(dm2)
            aux = aux.at[:, o_d3:o_d3 + N1].set(dm3)
            aux = aux.at[:, o_eps:o_eps + L].set(eps)
            aux = aux.at[:, o_msk:o_msk + 1].set(bmask)

            # ---------------- the fused kernel (everything VMEM-resident, one launch)
            def kernel(x_ref, aux_ref, rows_ref, w1_ref, w2_ref, wt1_ref, wt2_ref, ws_ref,
                       xrec_ref, small_ref):
                f32 = jnp.float32

                def R(name):                                   # (1, n) bias/gamma/beta row
                    i, n = row_offs[name]
                    return rows_ref[i:i + 1, 0:n]

                def WS(name):                                  # small bf16 weight window
                    off, r, cc = ws_offs[name]
                    return ws_ref[off:off + r, 0:cc]

                def mm(a, w, bname):                           # bf16 MXU matmul, f32 accumulate
                    return jnp.dot(a.astype(w.dtype), w, preferred_element_type=f32) + R(bname)

                bmask_v = aux_ref[:, o_msk:o_msk + 1]          # 1 for real rows, 0 for padding
                relu = lambda v: jnp.maximum(v, 0.0)

                def dropout(y, off, n):
                    if not training:
                        return y
                    return y * aux_ref[:, off:off + n]          # mask already holds 0 / 2

                def bn2d(y, g, be, ind, indt, hw):
                    # training-mode BatchNorm2d, exact over the B real rows (biased variance);
                    # reduce & broadcast over the channel-interleaved layout via fused
                    # 2-row indicator matmuls.
                    n = float(B * hw)
                    ym = y * bmask_v
                    s = jnp.concatenate([jnp.sum(ym, axis=0, keepdims=True),
                                         jnp.sum(ym * y, axis=0, keepdims=True)], axis=0)
                    st = jnp.dot(s.astype(ind.dtype), ind, preferred_element_type=f32) / n
                    mean = st[0:1]
                    var = jnp.maximum(st[1:2] - mean * mean, 0.0)
                    scale = R(g) * lax.rsqrt(var + _BN_EPS)
                    shift = R(be) - mean * scale
                    bc = jnp.dot(jnp.concatenate([scale, shift], axis=0).astype(indt.dtype),
                                 indt, preferred_element_type=f32)
                    return y * bc[0:1] + bc[1:2]

                def bn1d(y, g, be):
                    n = float(B)
                    ym = y * bmask_v
                    mean = jnp.sum(ym, axis=0, keepdims=True) / n
                    var = jnp.maximum(jnp.sum(ym * y, axis=0, keepdims=True) / n - mean * mean,
                                      0.0)
                    scale = R(g) * lax.rsqrt(var + _BN_EPS)
                    return y * scale + (R(be) - mean * scale)

                ind1, ind1t = WS("ind1"), WS("ind1t")
                ind2, ind2t = WS("ind2"), WS("ind2t")

                # ---- encoder: conv1 -> bn -> drop -> relu -> conv2 -> bn -> drop -> relu
                h = mm(x_ref[...], w1_ref[...], "b1")                               # (Bp, N1)
                h = relu(dropout(bn2d(h, "g1", "be1", ind1, ind1t, d1 * d1), o_d1, N1))
                h = mm(h, w2_ref[...], "b2")                                        # (Bp, N2)
                h = relu(dropout(bn2d(h, "g2", "be2", ind2, ind2t, d2 * d2), o_d2, N2))

                # ---- fused fc_mu | fc_logvar, then reparameterization
                mulv = mm(h, WS("wmulv"), "bmulv")                                  # (Bp, 2L)
                mu, lv = mulv[:, 0:L], mulv[:, L:2 * L]
                if training:
                    z = mu + aux_ref[:, o_eps:o_eps + L] * jnp.exp(0.5 * lv)
                else:
                    z = mu

                # ---- decoder: fc -> relu -> convT1 -> bn -> drop -> relu -> convT2 (-> sigmoid)
                d = relu(mm(z, WS("wfc"), "bfc"))                                   # (Bp, N2)
                d = mm(d, wt1_ref[...], "bt1")                                      # (Bp, N1)
                d = relu(dropout(bn2d(d, "g12", "be12", ind1, ind1t, d1 * d1), o_d3, N1))
                xr = mm(d, wt2_ref[...], "bt2")                                     # (Bp, S*S)
                if sigmoid_out:
                    xr = jax.nn.sigmoid(xr)
                xrec_ref[...] = xr

                # ---- burned predictor on z[:, rec_dim:] (slice folded into zero-padded wr1)
                p = mm(z, WS("wr1"), "br1")
                p = relu(bn1d(p, "gr1", "ber1"))
                p = mm(p, WS("wr2"), "br2")
                p = relu(bn1d(p, "gr2", "ber2"))
                p = jax.nn.sigmoid(mm(p, WS("wr4"), "br4"))                          # (Bp, 128-2L)
                # one lane-dense (Bp,128) slab: [mu | logvar | r_pred ...] -> single full store
                small_ref[...] = jnp.concatenate([mulv, p], axis=1)

            mm_shapes = [(4 * S * S, N1), (N1, N2), (N2, 2 * L), (L, N2), (N2, N1),
                         (N1, S * S), (L, 128), (128, 64), (64, pw)]
            flops = 2 * Bp * sum(a * b for a, b in mm_shapes)
            operands = (x_flat, aux, rows, w1, w2, wt1, wt2, ws)
            n_bytes = int(sum(int(np.prod(a.shape)) * jnp.dtype(a.dtype).itemsize
                              for a in operands)) + 4 * Bp * (S * S + 128)

            xr_out, small = pl.pallas_call(
                kernel,
                out_shape=(jax.ShapeDtypeStruct((Bp, S * S), jnp.float32),
                           jax.ShapeDtypeStruct((Bp, 128), jnp.float32)),
                in_specs=[_VMEM] * 8,
                out_specs=(_VMEM, _VMEM),
                cost_estimate=pl.CostEstimate(flops=flops,
                                              transcendentals=Bp * (S * S + pw + 2 * L),
                                              bytes_accessed=n_bytes),
            )(x_flat, aux, rows, w1, w2, wt1, wt2, ws)

            x_recon = xr_out[:B].reshape(B, S, S)[:, None, :, :]        # back to NCHW, OC=1
            mu_o = small[:B, 0:L]
            lv_o = small[:B, L:2 * L]
            r_pred = small[:B, 2 * L:2 * L + 1]
            return x_recon, r_pred, mu_o, lv_o

        return jax.jit(fwd)

    # ---------- public forward (matches the torch module's training-mode semantics)
    def forward(self, x, r, rng):
        # x: (B, 4, H, W) NCHW; r is unused (overwritten by the burned predictor, as in torch).
        del r
        return self._fwd(x, rng, self._rows, self._w1, self._w2, self._wt1, self._wt2, self._ws)


# ------------------------------------------------------------------ main

if __name__ == "__main__":
    params = dict(instance=0, latent_dims=8, capacity=4, input_size=16,
                  distribution_std=1.0, sigmoid=True, lr1=1e-3, lr2=1e-3,
                  not_reduced=False, variational_beta=1.0, use_gpu=False,
                  latent_portion=0.5, alpha=1.0)

    key = jax.random.PRNGKey(0)
    kx, kr, krng = jax.random.split(key, 3)
    x = jax.random.uniform(kx, (2, 4, 16, 16), dtype=jnp.float32)   # NCHW, like PyTorch
    r = jax.random.uniform(kr, (2, 1), dtype=jnp.float32)

    model = CCVAEPallas(params, jax.random.PRNGKey(1234))
    x_recon, r_pred, mu, logvar = model.forward(x, r, krng)
    jax.block_until_ready((x_recon, r_pred, mu, logvar))

    assert x_recon.shape == (2, 1, 16, 16), x_recon.shape
    assert r_pred.shape == (2, 1), r_pred.shape
    assert mu.shape == (2, 8) and logvar.shape == (2, 8)
    assert bool(jnp.all(jnp.isfinite(x_recon))) and bool(jnp.all(jnp.isfinite(r_pred)))
    assert bool(jnp.all(jnp.isfinite(mu))) and bool(jnp.all(jnp.isfinite(logvar)))
    assert bool(jnp.all((r_pred >= 0.0) & (r_pred <= 1.0)))
    print("KERNEL_OK")
</pallas_src>

<mosaic_0001>
module attributes {stable_mosaic.version = 11 : i64} {
  func.func @kernel(%arg0: memref<8x1024xf32, #tpu.memory_space<vmem>>, %arg1: memref<8x896xf32, #tpu.memory_space<vmem>>, %arg2: memref<152x256xf32, #tpu.memory_space<vmem>>, %arg3: memref<1024x256xbf16, #tpu.memory_space<vmem>>, %arg4: memref<256x128xbf16, #tpu.memory_space<vmem>>, %arg5: memref<128x256xbf16, #tpu.memory_space<vmem>>, %arg6: memref<256x256xbf16, #tpu.memory_space<vmem>>, %arg7: memref<768x256xbf16, #tpu.memory_space<vmem>>, %arg8: memref<8x256xf32, #tpu.memory_space<vmem>>, %arg9: memref<8x128xf32, #tpu.memory_space<vmem>>) attributes {dimension_semantics = [], scalar_prefetch = 0 : i64, scratch_operands = 0 : i64, tpu.core_type = #tpu.core_type<tc>} {
    %c0 = arith.constant 0 : index
    %c768 = arith.constant 768 : index
    %0 = vector.load %arg1[%c0, %c768] : memref<8x896xf32, #tpu.memory_space<vmem>>, vector<8x1xf32>
    %c352 = arith.constant 352 : index
    %c0_0 = arith.constant 0 : index
    %1 = vector.load %arg7[%c352, %c0_0] : memref<768x256xbf16, #tpu.memory_space<vmem>>, vector<256x4xbf16>
    %c608 = arith.constant 608 : index
    %c0_1 = arith.constant 0 : index
    %2 = vector.load %arg7[%c608, %c0_1] : memref<768x256xbf16, #tpu.memory_space<vmem>>, vector<4x256xbf16>
    %c624 = arith.constant 624 : index
    %c0_2 = arith.constant 0 : index
    %3 = vector.load %arg7[%c624, %c0_2] : memref<768x256xbf16, #tpu.memory_space<vmem>>, vector<128x8xbf16>
    %c752 = arith.constant 752 : index
    %c0_3 = arith.constant 0 : index
    %4 = vector.load %arg7[%c752, %c0_3] : memref<768x256xbf16, #tpu.memory_space<vmem>>, vector<8x128xbf16>
    %c0_4 = arith.constant 0 : index
    %c0_5 = arith.constant 0 : index
    %5 = vector.load %arg0[%c0_4, %c0_5] : memref<8x1024xf32, #tpu.memory_space<vmem>>, vector<8x1024xf32>
    %c0_6 = arith.constant 0 : index
    %c0_7 = arith.constant 0 : index
    %6 = vector.load %arg3[%c0_6, %c0_7] : memref<1024x256xbf16, #tpu.memory_space<vmem>>, vector<1024x256xbf16>
    %7 = arith.truncf %5 : vector<8x1024xf32> to vector<8x1024xbf16>
    %cst = arith.constant dense<0.000000e+00> : vector<8x256xf32>
    %8 = tpu.matmul %7, %6, %cst {dimension_numbers = #tpu.dot_dimension_numbers<[1], [0], [0], [1], [0, 0, 1, 1], [], []>} : vector<8x1024xbf16>, vector<1024x256xbf16>, vector<8x256xf32> -> vector<8x256xf32>
    %c0_8 = arith.constant 0 : index
    %c0_9 = arith.constant 0 : index
    %9 = vector.load %arg2[%c0_8, %c0_9] : memref<152x256xf32, #tpu.memory_space<vmem>>, vector<1x256xf32>
    %10 = vector.broadcast %9 : vector<1x256xf32> to vector<8x256xf32>
    %11 = arith.addf %8, %10 : vector<8x256xf32>
    %12 = vector.broadcast %0 : vector<8x1xf32> to vector<8x256xf32>
    %13 = arith.mulf %11, %12 : vector<8x256xf32>
    %cst_10 = arith.constant dense<0.000000e+00> : vector<256xf32>
    %14 = vector.multi_reduction <add>, %13, %cst_10 [0] : vector<8x256xf32> to vector<256xf32>
    %15 = vector.shape_cast %14 : vector<256xf32> to vector<1x256xf32>
    %16 = arith.mulf %13, %11 : vector<8x256xf32>
    %cst_11 = arith.constant dense<0.000000e+00> : vector<256xf32>
    %17 = vector.multi_reduction <add>, %16, %cst_11 [0] : vector<8x256xf32> to vector<256xf32>
    %18 = vector.shape_cast %17 : vector<256xf32> to vector<1x256xf32>
    %19 = tpu.concatenate %15, %18 in 0 : vector<1x256xf32>, vector<1x256xf32> -> vector<2x256xf32>
    %20 = arith.truncf %19 : vector<2x256xf32> to vector<2x256xbf16>
    %cst_12 = arith.constant dense<0.000000e+00> : vector<2x4xf32>
    %21 = tpu.matmul %20, %1, %cst_12 {dimension_numbers = #tpu.dot_dimension_numbers<[1], [0], [0], [1], [0, 0, 1, 1], [], []>} : vector<2x256xbf16>, vector<256x4xbf16>, vector<2x4xf32> -> vector<2x4xf32>
    %cst_13 = arith.constant 1.280000e+02 : f32
    %22 = vector.broadcast %cst_13 : f32 to vector<2x4xf32>
    %23 = arith.divf %21, %22 : vector<2x4xf32>
    %24 = vector.extract_strided_slice %23 {offsets = [0, 0], sizes = [1, 4], strides = [1, 1]} : vector<2x4xf32> to vector<1x4xf32>
    %25 = vector.extract_strided_slice %23 {offsets = [1, 0], sizes = [1, 4], strides = [1, 1]} : vector<2x4xf32> to vector<1x4xf32>
    %26 = arith.mulf %24, %24 : vector<1x4xf32>
    %27 = arith.subf %25, %26 : vector<1x4xf32>
    %cst_14 = arith.constant 0.000000e+00 : f32
    %28 = vector.broadcast %cst_14 : f32 to vector<1x4xf32>
    %29 = arith.maximumf %27, %28 : vector<1x4xf32>
    %c8 = arith.constant 8 : index
    %c0_15 = arith.constant 0 : index
    %30 = vector.load %arg2[%c8, %c0_15] : memref<152x256xf32, #tpu.memory_space<vmem>>, vector<1x4xf32>
    %cst_16 = arith.constant 9.99999974E-6 : f32
    %31 = vector.broadcast %cst_16 : f32 to vector<1x4xf32>
    %32 = arith.addf %29, %31 : vector<1x4xf32>
    %33 = math.rsqrt %32 : vector<1x4xf32>
    %34 = arith.mulf %30, %33 : vector<1x4xf32>
    %c16 = arith.constant 16 : index
    %c0_17 = arith.constant 0 : index
    %35 = vector.load %arg2[%c16, %c0_17] : memref<152x256xf32, #tpu.memory_space<vmem>>, vector<1x4xf32>
    %36 = arith.mulf %24, %34 : vector<1x4xf32>
    %37 = arith.subf %35, %36 : vector<1x4xf32>
    %38 = tpu.concatenate %34, %37 in 0 : vector<1x4xf32>, vector<1x4xf32> -> vector<2x4xf32>
    %39 = arith.truncf %38 : vector<2x4xf32> to vector<2x4xbf16>
    %cst_18 = arith.constant dense<0.000000e+00> : vector<2x256xf32>
    %40 = tpu.matmul %39, %2, %cst_18 {dimension_numbers = #tpu.dot_dimension_numbers<[1], [0], [0], [1], [0, 0, 1, 1], [], []>} : vector<2x4xbf16>, vector<4x256xbf16>, vector<2x256xf32> -> vector<2x256xf32>
    %41 = vector.extract_strided_slice %40 {offsets = [0, 0], sizes = [1, 256], strides = [1, 1]} : vector<2x256xf32> to vector<1x256xf32>
    %42 = vector.broadcast %41 : vector<1x256xf32> to vector<8x256xf32>
    %43 = arith.mulf %11, %42 : vector<8x256xf32>
    %44 = vector.extract_strided_slice %40 {offsets = [1, 0], sizes = [1, 256], strides = [1, 1]} : vector<2x256xf32> to vector<1x256xf32>
    %45 = vector.broadcast %44 : vector<1x256xf32> to vector<8x256xf32>
    %46 = arith.addf %43, %45 : vector<8x256xf32>
    %c0_19 = arith.constant 0 : index
    %c0_20 = arith.constant 0 : index
    %47 = vector.load %arg1[%c0_19, %c0_20] : memref<8x896xf32, #tpu.memory_space<vmem>>, vector<8x256xf32>
    %48 = arith.mulf %46, %47 : vector<8x256xf32>
    %cst_21 = arith.constant 0.000000e+00 : f32
    %49 = vector.broadcast %cst_21 : f32 to vector<8x256xf32>
    %50 = arith.maximumf %48, %49 : vector<8x256xf32>
    %c0_22 = arith.constant 0 : index
    %c0_23 = arith.constant 0 : index
    %51 = vector.load %arg4[%c0_22, %c0_23] : memref<256x128xbf16, #tpu.memory_space<vmem>>, vector<256x128xbf16>
    %52 = arith.truncf %50 : vector<8x256xf32> to vector<8x256xbf16>
    %cst_24 = arith.constant dense<0.000000e+00> : vector<8x128xf32>
    %53 = tpu.matmul %52, %51, %cst_24 {dimension_numbers = #tpu.dot_dimension_numbers<[1], [0], [0], [1], [0, 0, 1, 1], [], []>} : vector<8x256xbf16>, vector<256x128xbf16>, vector<8x128xf32> -> vector<8x128xf32>
    %c24 = arith.constant 24 : index
    %c0_25 = arith.constant 0 : index
    %54 = vector.load %arg2[%c24, %c0_25] : memref<152x256xf32, #tpu.memory_space<vmem>>, vector<1x128xf32>
    %55 = vector.broadcast %54 : vector<1x128xf32> to vector<8x128xf32>
    %56 = arith.addf %53, %55 : vector<8x128xf32>
    %57 = vector.broadcast %0 : vector<8x1xf32> to vector<8x128xf32>
    %58 = arith.mulf %56, %57 : vector<8x128xf32>
    %cst_26 = arith.constant dense<0.000000e+00> : vector<128xf32>
    %59 = vector.multi_reduction <add>, %58, %cst_26 [0] : vector<8x128xf32> to vector<128xf32>
    %60 = vector.shape_cast %59 : vector<128xf32> to vector<1x128xf32>
    %61 = arith.mulf %58, %56 : vector<8x128xf32>
    %cst_27 = arith.constant dense<0.000000e+00> : vector<128xf32>
    %62 = vector.multi_reduction <add>, %61, %cst_27 [0] : vector<8x128xf32> to vector<128xf32>
    %63 = vector.shape_cast %62 : vector<128xf32> to vector<1x128xf32>
    %64 = tpu.concatenate %60, %63 in 0 : vector<1x128xf32>, vector<1x128xf32> -> vector<2x128xf32>
    %65 = arith.truncf %64 : vector<2x128xf32> to vector<2x128xbf16>
    %cst_28 = arith.constant dense<0.000000e+00> : vector<2x8xf32>
    %66 = tpu.matmul %65, %3, %cst_28 {dimension_numbers = #tpu.dot_dimension_numbers<[1], [0], [0], [1], [0, 0, 1, 1], [], []>} : vector<2x128xbf16>, vector<128x8xbf16>, vector<2x8xf32> -> vector<2x8xf32>
    %cst_29 = arith.constant 3.200000e+01 : f32
    %67 = vector.broadcast %cst_29 : f32 to vector<2x8xf32>
    %68 = arith.divf %66, %67 : vector<2x8xf32>
    %69 = vector.extract_strided_slice %68 {offsets = [0, 0], sizes = [1, 8], strides = [1, 1]} : vector<2x8xf32> to vector<1x8xf32>
    %70 = vector.extract_strided_slice %68 {offsets = [1, 0], sizes = [1, 8], strides = [1, 1]} : vector<2x8xf32> to vector<1x8xf32>
    %71 = arith.mulf %69, %69 : vector<1x8xf32>
    %72 = arith.subf %70, %71 : vector<1x8xf32>
    %cst_30 = arith.constant 0.000000e+00 : f32
    %73 = vector.broadcast %cst_30 : f32 to vector<1x8xf32>
    %74 = arith.maximumf %72, %73 : vector<1x8xf32>
    %c32 = arith.constant 32 : index
    %c0_31 = arith.constant 0 : index
    %75 = vector.load %arg2[%c32, %c0_31] : memref<152x256xf32, #tpu.memory_space<vmem>>, vector<1x8xf32>
    %cst_32 = arith.constant 9.99999974E-6 : f32
    %76 = vector.broadcast %cst_32 : f32 to vector<1x8xf32>
    %77 = arith.addf %74, %76 : vector<1x8xf32>
    %78 = math.rsqrt %77 : vector<1x8xf32>
    %79 = arith.mulf %75, %78 : vector<1x8xf32>
    %c40 = arith.constant 40 : index
    %c0_33 = arith.constant 0 : index
    %80 = vector.load %arg2[%c40, %c0_33] : memref<152x256xf32, #tpu.memory_space<vmem>>, vector<1x8xf32>
    %81 = arith.mulf %69, %79 : vector<1x8xf32>
    %82 = arith.subf %80, %81 : vector<1x8xf32>
    %83 = tpu.concatenate %79, %82 in 0 : vector<1x8xf32>, vector<1x8xf32> -> vector<2x8xf32>
    %84 = arith.truncf %83 : vector<2x8xf32> to vector<2x8xbf16>
    %cst_34 = arith.constant dense<0.000000e+00> : vector<2x128xf32>
    %85 = tpu.matmul %84, %4, %cst_34 {dimension_numbers = #tpu.dot_dimension_numbers<[1], [0], [0], [1], [0, 0, 1, 1], [], []>} : vector<2x8xbf16>, vector<8x128xbf16>, vector<2x128xf32> -> vector<2x128xf32>
    %86 = vector.extract_strided_slice %85 {offsets = [0, 0], sizes = [1, 128], strides = [1, 1]} : vector<2x128xf32> to vector<1x128xf32>
    %87 = vector.broadcast %86 : vector<1x128xf32> to vector<8x128xf32>
    %88 = arith.mulf %56, %87 : vector<8x128xf32>
    %89 = vector.extract_strided_slice %85 {offsets = [1, 0], sizes = [1, 128], strides = [1, 1]} : vector<2x128xf32> to vector<1x128xf32>
    %90 = vector.broadcast %89 : vector<1x128xf32> to vector<8x128xf32>
    %91 = arith.addf %88, %90 : vector<8x128xf32>
    %c0_35 = arith.constant 0 : index
    %c256 = arith.constant 256 : index
    %92 = vector.load %arg1[%c0_35, %c256] : memref<8x896xf32, #tpu.memory_space<vmem>>, vector<8x128xf32>
    %93 = arith.mulf %91, %92 : vector<8x128xf32>
    %cst_36 = arith.constant 0.000000e+00 : f32
    %94 = vector.broadcast %cst_36 : f32 to vector<8x128xf32>
    %95 = arith.maximumf %93, %94 : vector<8x128xf32>
    %c0_37 = arith.constant 0 : index
    %c0_38 = arith.constant 0 : index
    %96 = vector.load %arg7[%c0_37, %c0_38] : memref<768x256xbf16, #tpu.memory_space<vmem>>, vector<128x16xbf16>
    %97 = arith.truncf %95 : vector<8x128xf32> to vector<8x128xbf16>
    %cst_39 = arith.constant dense<0.000000e+00> : vector<8x16xf32>
    %98 = tpu.matmul %97, %96, %cst_39 {dimension_numbers = #tpu.dot_dimension_numbers<[1], [0], [0], [1], [0, 0, 1, 1], [], []>} : vector<8x128xbf16>, vector<128x16xbf16>, vector<8x16xf32> -> vector<8x16xf32>
    %c48 = arith.constant 48 : index
    %c0_40 = arith.constant 0 : index
    %99 = vector.load %arg2[%c48, %c0_40] : memref<152x256xf32, #tpu.memory_space<vmem>>, vector<1x16xf32>
    %100 = vector.broadcast %99 : vector<1x16xf32> to vector<8x16xf32>
    %101 = arith.addf %98, %100 : vector<8x16xf32>
    %102 = vector.extract_strided_slice %101 {offsets = [0, 0], sizes = [8, 8], strides = [1, 1]} : vector<8x16xf32> to vector<8x8xf32>
    %103 = vector.extract_strided_slice %101 {offsets = [0, 8], sizes = [8, 8], strides = [1, 1]} : vector<8x16xf32> to vector<8x8xf32>
    %c0_41 = arith.constant 0 : index
    %c640 = arith.constant 640 : index
    %104 = vector.load %arg1[%c0_41, %c640] : memref<8x896xf32, #tpu.memory_space<vmem>>, vector<8x8xf32>
    %cst_42 = arith.constant 5.000000e-01 : f32
    %105 = vector.broadcast %cst_42 : f32 to vector<8x8xf32>
    %106 = arith.mulf %105, %103 : vector<8x8xf32>
    %107 = math.exp %106 : vector<8x8xf32>
    %108 = arith.mulf %104, %107 : vector<8x8xf32>
    %109 = arith.addf %102, %108 : vector<8x8xf32>
    %c128 = arith.constant 128 : index
    %c0_43 = arith.constant 0 : index
    %110 = vector.load %arg7[%c128, %c0_43] : memref<768x256xbf16, #tpu.memory_space<vmem>>, vector<8x128xbf16>
    %111 = arith.truncf %109 : vector<8x8xf32> to vector<8x8xbf16>
    %cst_44 = arith.constant dense<0.000000e+00> : vector<8x128xf32>
    %112 = tpu.matmul %111, %110, %cst_44 {dimension_numbers = #tpu.dot_dimension_numbers<[1], [0], [0], [1], [0, 0, 1, 1], [], []>} : vector<8x8xbf16>, vector<8x128xbf16>, vector<8x128xf32> -> vector<8x128xf32>
    %c56 = arith.constant 56 : index
    %c0_45 = arith.constant 0 : index
    %113 = vector.load %arg2[%c56, %c0_45] : memref<152x256xf32, #tpu.memory_space<vmem>>, vector<1x128xf32>
    %114 = vector.broadcast %113 : vector<1x128xf32> to vector<8x128xf32>
    %115 = arith.addf %112, %114 : vector<8x128xf32>
    %cst_46 = arith.constant 0.000000e+00 : f32
    %116 = vector.broadcast %cst_46 : f32 to vector<8x128xf32>
    %117 = arith.maximumf %115, %116 : vector<8x128xf32>
    %c0_47 = arith.constant 0 : index
    %c0_48 = arith.constant 0 : index
    %118 = vector.load %arg5[%c0_47, %c0_48] : memref<128x256xbf16, #tpu.memory_space<vmem>>, vector<128x256xbf16>
    %119 = arith.truncf %117 : vector<8x128xf32> to vector<8x128xbf16>
    %cst_49 = arith.constant dense<0.000000e+00> : vector<8x256xf32>
    %120 = tpu.matmul %119, %118, %cst_49 {dimension_numbers = #tpu.dot_dimension_numbers<[1], [0], [0], [1], [0, 0, 1, 1], [], []>} : vector<8x128xbf16>, vector<128x256xbf16>, vector<8x256xf32> -> vector<8x256xf32>
    %c64 = arith.constant 64 : index
    %c0_50 = arith.constant 0 : index
    %121 = vector.load %arg2[%c64, %c0_50] : memref<152x256xf32, #tpu.memory_space<vmem>>, vector<1x256xf32>
    %122 = vector.broadcast %121 : vector<1x256xf32> to vector<8x256xf32>
    %123 = arith.addf %120, %122 : vector<8x256xf32>
    %124 = vector.broadcast %0 : vector<8x1xf32> to vector<8x256xf32>
    %125 = arith.mulf %123, %124 : vector<8x256xf32>
    %cst_51 = arith.constant dense<0.000000e+00> : vector<256xf32>
    %126 = vector.multi_reduction <add>, %125, %cst_51 [0] : vector<8x256xf32> to vector<256xf32>
    %127 = vector.shape_cast %126 : vector<256xf32> to vector<1x256xf32>
    %128 = arith.mulf %125, %123 : vector<8x256xf32>
    %cst_52 = arith.constant dense<0.000000e+00> : vector<256xf32>
    %129 = vector.multi_reduction <add>, %128, %cst_52 [0] : vector<8x256xf32> to vector<256xf32>
    %130 = vector.shape_cast %129 : vector<256xf32> to vector<1x256xf32>
    %131 = tpu.concatenate %127, %130 in 0 : vector<1x256xf32>, vector<1x256xf32> -> vector<2x256xf32>
    %132 = arith.truncf %131 : vector<2x256xf32> to vector<2x256xbf16>
    %cst_53 = arith.constant dense<0.000000e+00> : vector<2x4xf32>
    %133 = tpu.matmul %132, %1, %cst_53 {dimension_numbers = #tpu.dot_dimension_numbers<[1], [0], [0], [1], [0, 0, 1, 1], [], []>} : vector<2x256xbf16>, vector<256x4xbf16>, vector<2x4xf32> -> vector<2x4xf32>
    %cst_54 = arith.constant 1.280000e+02 : f32
    %134 = vector.broadcast %cst_54 : f32 to vector<2x4xf32>
    %135 = arith.divf %133, %134 : vector<2x4xf32>
    %136 = vector.extract_strided_slice %135 {offsets = [0, 0], sizes = [1, 4], strides = [1, 1]} : vector<2x4xf32> to vector<1x4xf32>
    %137 = vector.extract_strided_slice %135 {offsets = [1, 0], sizes = [1, 4], strides = [1, 1]} : vector<2x4xf32> to vector<1x4xf32>
    %138 = arith.mulf %136, %136 : vector<1x4xf32>
    %139 = arith.subf %137, %138 : vector<1x4xf32>
    %cst_55 = arith.constant 0.000000e+00 : f32
    %140 = vector.broadcast %cst_55 : f32 to vector<1x4xf32>
    %141 = arith.maximumf %139, %140 : vector<1x4xf32>
    %c72 = arith.constant 72 : index
    %c0_56 = arith.constant 0 : index
    %142 = vector.load %arg2[%c72, %c0_56] : memref<152x256xf32, #tpu.memory_space<vmem>>, vector<1x4xf32>
    %cst_57 = arith.constant 9.99999974E-6 : f32
    %143 = vector.broadcast %cst_57 : f32 to vector<1x4xf32>
    %144 = arith.addf %141, %143 : vector<1x4xf32>
    %145 = math.rsqrt %144 : vector<1x4xf32>
    %146 = arith.mulf %142, %145 : vector<1x4xf32>
    %c80 = arith.constant 80 : index
    %c0_58 = arith.constant 0 : index
    %147 = vector.load %arg2[%c80, %c0_58] : memref<152x256xf32, #tpu.memory_space<vmem>>, vector<1x4xf32>
    %148 = arith.mulf %136, %146 : vector<1x4xf32>
    %149 = arith.subf %147, %148 : vector<1x4xf32>
    %150 = tpu.concatenate %146, %149 in 0 : vector<1x4xf32>, vector<1x4xf32> -> vector<2x4xf32>
    %151 = arith.truncf %150 : vector<2x4xf32> to vector<2x4xbf16>
    %cst_59 = arith.constant dense<0.000000e+00> : vector<2x256xf32>
    %152 = tpu.matmul %151, %2, %cst_59 {dimension_numbers = #tpu.dot_dimension_numbers<[1], [0], [0], [1], [0, 0, 1, 1], [], []>} : vector<2x4xbf16>, vector<4x256xbf16>, vector<2x256xf32> -> vector<2x256xf32>
    %153 = vector.extract_strided_slice %152 {offsets = [0, 0], sizes = [1, 256], strides = [1, 1]} : vector<2x256xf32> to vector<1x256xf32>
    %154 = vector.broadcast %153 : vector<1x256xf32> to vector<8x256xf32>
    %155 = arith.mulf %123, %154 : vector<8x256xf32>
    %156 = vector.extract_strided_slice %152 {offsets = [1, 0], sizes = [1, 256], strides = [1, 1]} : vector<2x256xf32> to vector<1x256xf32>
    %157 = vector.broadcast %156 : vector<1x256xf32> to vector<8x256xf32>
    %158 = arith.addf %155, %157 : vector<8x256xf32>
    %c0_60 = arith.constant 0 : index
    %c384 = arith.constant 384 : index
    %159 = vector.load %arg1[%c0_60, %c384] : memref<8x896xf32, #tpu.memory_space<vmem>>, vector<8x256xf32>
    %160 = arith.mulf %158, %159 : vector<8x256xf32>
    %cst_61 = arith.constant 0.000000e+00 : f32
    %161 = vector.broadcast %cst_61 : f32 to vector<8x256xf32>
    %162 = arith.maximumf %160, %161 : vector<8x256xf32>
    %c0_62 = arith.constant 0 : index
    %c0_63 = arith.constant 0 : index
    %163 = vector.load %arg6[%c0_62, %c0_63] : memref<256x256xbf16, #tpu.memory_space<vmem>>, vector<256x256xbf16>
    %164 = arith.truncf %162 : vector<8x256xf32> to vector<8x256xbf16>
    %cst_64 = arith.constant dense<0.000000e+00> : vector<8x256xf32>
    %165 = tpu.matmul %164, %163, %cst_64 {dimension_numbers = #tpu.dot_dimension_numbers<[1], [0], [0], [1], [0, 0, 1, 1], [], []>} : vector<8x256xbf16>, vector<256x256xbf16>, vector<8x256xf32> -> vector<8x256xf32>
    %c88 = arith.constant 88 : index
    %c0_65 = arith.constant 0 : index
    %166 = vector.load %arg2[%c88, %c0_65] : memref<152x256xf32, #tpu.memory_space<vmem>>, vector<1x256xf32>
    %167 = vector.broadcast %166 : vector<1x256xf32> to vector<8x256xf32>
    %168 = arith.addf %165, %167 : vector<8x256xf32>
    %169 = arith.negf %168 : vector<8x256xf32>
    %170 = math.exp %169 : vector<8x256xf32>
    %cst_66 = arith.constant 1.000000e+00 : f32
    %171 = vector.broadcast %cst_66 : f32 to vector<8x256xf32>
    %172 = arith.addf %171, %170 : vector<8x256xf32>
    %173 = arith.divf %171, %172 : vector<8x256xf32>
    %c0_67 = arith.constant 0 : index
    %c0_68 = arith.constant 0 : index
    %174 = vector.load %arg8[%c0_67, %c0_68] : memref<8x256xf32, #tpu.memory_space<vmem>>, vector<8x256xf32>
    tpu.vector_store %arg8[%c0_67, %c0_68], %173 {strides = array<i32>} : memref<8x256xf32, #tpu.memory_space<vmem>>, vector<8x256xf32>,
    %c144 = arith.constant 144 : index
    %c0_69 = arith.constant 0 : index
    %175 = vector.load %arg7[%c144, %c0_69] : memref<768x256xbf16, #tpu.memory_space<vmem>>, vector<8x128xbf16>
    %176 = arith.truncf %109 : vector<8x8xf32> to vector<8x8xbf16>
    %cst_70 = arith.constant dense<0.000000e+00> : vector<8x128xf32>
    %177 = tpu.matmul %176, %175, %cst_70 {dimension_numbers = #tpu.dot_dimension_numbers<[1], [0], [0], [1], [0, 0, 1, 1], [], []>} : vector<8x8xbf16>, vector<8x128xbf16>, vector<8x128xf32> -> vector<8x128xf32>
    %c96 = arith.constant 96 : index
    %c0_71 = arith.constant 0 : index
    %178 = vector.load %arg2[%c96, %c0_71] : memref<152x256xf32, #tpu.memory_space<vmem>>, vector<1x128xf32>
    %179 = vector.broadcast %178 : vector<1x128xf32> to vector<8x128xf32>
    %180 = arith.addf %177, %179 : vector<8x128xf32>
    %181 = vector.broadcast %0 : vector<8x1xf32> to vector<8x128xf32>
    %182 = arith.mulf %180, %181 : vector<8x128xf32>
    %cst_72 = arith.constant dense<0.000000e+00> : vector<128xf32>
    %183 = vector.multi_reduction <add>, %182, %cst_72 [0] : vector<8x128xf32> to vector<128xf32>
    %184 = vector.shape_cast %183 : vector<128xf32> to vector<1x128xf32>
    %cst_73 = arith.constant 2.000000e+00 : f32
    %185 = vector.broadcast %cst_73 : f32 to vector<1x128xf32>
    %186 = arith.divf %184, %185 : vector<1x128xf32>
    %187 = arith.mulf %182, %180 : vector<8x128xf32>
    %cst_74 = arith.constant dense<0.000000e+00> : vector<128xf32>
    %188 = vector.multi_reduction <add>, %187, %cst_74 [0] : vector<8x128xf32> to vector<128xf32>
    %189 = vector.shape_cast %188 : vector<128xf32> to vector<1x128xf32>
    %cst_75 = arith.constant 2.000000e+00 : f32
    %190 = vector.broadcast %cst_75 : f32 to vector<1x128xf32>
    %191 = arith.divf %189, %190 : vector<1x128xf32>
    %192 = arith.mulf %186, %186 : vector<1x128xf32>
    %193 = arith.subf %191, %192 : vector<1x128xf32>
    %cst_76 = arith.constant 0.000000e+00 : f32
    %194 = vector.broadcast %cst_76 : f32 to vector<1x128xf32>
    %195 = arith.maximumf %193, %194 : vector<1x128xf32>
    %c104 = arith.constant 104 : index
    %c0_77 = arith.constant 0 : index
    %196 = vector.load %arg2[%c104, %c0_77] : memref<152x256xf32, #tpu.memory_space<vmem>>, vector<1x128xf32>
    %cst_78 = arith.constant 9.99999974E-6 : f32
    %197 = vector.broadcast %cst_78 : f32 to vector<1x128xf32>
    %198 = arith.addf %195, %197 : vector<1x128xf32>
    %199 = math.rsqrt %198 : vector<1x128xf32>
    %200 = arith.mulf %196, %199 : vector<1x128xf32>
    %201 = vector.broadcast %200 : vector<1x128xf32> to vector<8x128xf32>
    %202 = arith.mulf %180, %201 : vector<8x128xf32>
    %c112 = arith.constant 112 : index
    %c0_79 = arith.constant 0 : index
    %203 = vector.load %arg2[%c112, %c0_79] : memref<152x256xf32, #tpu.memory_space<vmem>>, vector<1x128xf32>
    %204 = arith.mulf %186, %200 : vector<1x128xf32>
    %205 = arith.subf %203, %204 : vector<1x128xf32>
    %206 = vector.broadcast %205 : vector<1x128xf32> to vector<8x128xf32>
    %207 = arith.addf %202, %206 : vector<8x128xf32>
    %cst_80 = arith.constant 0.000000e+00 : f32
    %208 = vector.broadcast %cst_80 : f32 to vector<8x128xf32>
    %209 = arith.maximumf %207, %208 : vector<8x128xf32>
    %c160 = arith.constant 160 : index
    %c0_81 = arith.constant 0 : index
    %210 = vector.load %arg7[%c160, %c0_81] : memref<768x256xbf16, #tpu.memory_space<vmem>>, vector<128x64xbf16>
    %211 = arith.truncf %209 : vector<8x128xf32> to vector<8x128xbf16>
    %cst_82 = arith.constant dense<0.000000e+00> : vector<8x64xf32>
    %212 = tpu.matmul %211, %210, %cst_82 {dimension_numbers = #tpu.dot_dimension_numbers<[1], [0], [0], [1], [0, 0, 1, 1], [], []>} : vector<8x128xbf16>, vector<128x64xbf16>, vector<8x64xf32> -> vector<8x64xf32>
    %c120 = arith.constant 120 : index
    %c0_83 = arith.constant 0 : index
    %213 = vector.load %arg2[%c120, %c0_83] : memref<152x256xf32, #tpu.memory_space<vmem>>, vector<1x64xf32>
    %214 = vector.broadcast %213 : vector<1x64xf32> to vector<8x64xf32>
    %215 = arith.addf %212, %214 : vector<8x64xf32>
    %216 = vector.broadcast %0 : vector<8x1xf32> to vector<8x64xf32>
    %217 = arith.mulf %215, %216 : vector<8x64xf32>
    %cst_84 = arith.constant dense<0.000000e+00> : vector<64xf32>
    %218 = vector.multi_reduction <add>, %217, %cst_84 [0] : vector<8x64xf32> to vector<64xf32>
    %219 = vector.shape_cast %218 : vector<64xf32> to vector<1x64xf32>
    %cst_85 = arith.constant 2.000000e+00 : f32
    %220 = vector.broadcast %cst_85 : f32 to vector<1x64xf32>
    %221 = arith.divf %219, %220 : vector<1x64xf32>
    %222 = arith.mulf %217, %215 : vector<8x64xf32>
    %cst_86 = arith.constant dense<0.000000e+00> : vector<64xf32>
    %223 = vector.multi_reduction <add>, %222, %cst_86 [0] : vector<8x64xf32> to vector<64xf32>
    %224 = vector.shape_cast %223 : vector<64xf32> to vector<1x64xf32>
    %cst_87 = arith.constant 2.000000e+00 : f32
    %225 = vector.broadcast %cst_87 : f32 to vector<1x64xf32>
    %226 = arith.divf %224, %225 : vector<1x64xf32>
    %227 = arith.mulf %221, %221 : vector<1x64xf32>
    %228 = arith.subf %226, %227 : vector<1x64xf32>
    %cst_88 = arith.constant 0.000000e+00 : f32
    %229 = vector.broadcast %cst_88 : f32 to vector<1x64xf32>
    %230 = arith.maximumf %228, %229 : vector<1x64xf32>
    %c128_89 = arith.constant 128 : index
    %c0_90 = arith.constant 0 : index
    %231 = vector.load %arg2[%c128_89, %c0_90] : memref<152x256xf32, #tpu.memory_space<vmem>>, vector<1x64xf32>
    %cst_91 = arith.constant 9.99999974E-6 : f32
    %232 = vector.broadcast %cst_91 : f32 to vector<1x64xf32>
    %233 = arith.addf %230, %232 : vector<1x64xf32>
    %234 = math.rsqrt %233 : vector<1x64xf32>
    %235 = arith.mulf %231, %234 : vector<1x64xf32>
    %236 = vector.broadcast %235 : vector<1x64xf32> to vector<8x64xf32>
    %237 = arith.mulf %215, %236 : vector<8x64xf32>
    %c136 = arith.constant 136 : index
    %c0_92 = arith.constant 0 : index
    %238 = vector.load %arg2[%c136, %c0_92] : memref<152x256xf32, #tpu.memory_space<vmem>>, vector<1x64xf32>
    %239 = arith.mulf %221, %235 : vector<1x64xf32>
    %240 = arith.subf %238, %239 : vector<1x64xf32>
    %241 = vector.broadcast %240 : vector<1x64xf32> to vector<8x64xf32>
    %242 = arith.addf %237, %241 : vector<8x64xf32>
    %cst_93 = arith.constant 0.000000e+00 : f32
    %243 = vector.broadcast %cst_93 : f32 to vector<8x64xf32>
    %244 = arith.maximumf %242, %243 : vector<8x64xf32>
    %c288 = arith.constant 288 : index
    %c0_94 = arith.constant 0 : index
    %245 = vector.load %arg7[%c288, %c0_94] : memref<768x256xbf16, #tpu.memory_space<vmem>>, vector<64x112xbf16>
    %246 = arith.truncf %244 : vector<8x64xf32> to vector<8x64xbf16>
    %cst_95 = arith.constant dense<0.000000e+00> : vector<8x112xf32>
    %247 = tpu.matmul %246, %245, %cst_95 {dimension_numbers = #tpu.dot_dimension_numbers<[1], [0], [0], [1], [0, 0, 1, 1], [], []>} : vector<8x64xbf16>, vector<64x112xbf16>, vector<8x112xf32> -> vector<8x112xf32>
    %c144_96 = arith.constant 144 : index
    %c0_97 = arith.constant 0 : index
    %248 = vector.load %arg2[%c144_96, %c0_97] : memref<152x256xf32, #tpu.memory_space<vmem>>, vector<1x112xf32>
    %249 = vector.broadcast %248 : vector<1x112xf32> to vector<8x112xf32>
    %250 = arith.addf %247, %249 : vector<8x112xf32>
    %251 = arith.negf %250 : vector<8x112xf32>
    %252 = math.exp %251 : vector<8x112xf32>
    %cst_98 = arith.constant 1.000000e+00 : f32
    %253 = vector.broadcast %cst_98 : f32 to vector<8x112xf32>
    %254 = arith.addf %253, %252 : vector<8x112xf32>
    %255 = arith.divf %253, %254 : vector<8x112xf32>
    %256 = tpu.concatenate %101, %255 in 1 : vector<8x16xf32>, vector<8x112xf32> -> vector<8x128xf32>
    %c0_99 = arith.constant 0 : index
    %c0_100 = arith.constant 0 : index
    %257 = vector.load %arg9[%c0_99, %c0_100] : memref<8x128xf32, #tpu.memory_space<vmem>>, vector<8x128xf32>
    tpu.vector_store %arg9[%c0_99, %c0_100], %256 {strides = array<i32>} : memref<8x128xf32, #tpu.memory_space<vmem>>, vector<8x128xf32>,
    return
  }
}

</mosaic_0001>

<llo_original>
// kernel: fwd.1
$region0: #{fwd.1}
  #allocation0 [shape = 'u32[]', space=smem, size = 0x4, offset = 0x4, fixed_abs, tag = 'smem constant byte address 0x4 - core index']
  #allocation1 [shape = 'u32[72,128]{1,0:T(1,128)}', space=vmem, size = 0x9000, scoped, tag = 'internal scratch']
  %s0 = inlined_call_operand.vmem [shape: f32[8,1024], index: 0, kind: input, shape index: {}]
  %s1 = inlined_call_operand.vmem [shape: f32[8,896], index: 1, kind: input, shape index: {}]
  %s2 = inlined_call_operand.vmem [shape: f32[152,256], index: 2, kind: input, shape index: {}]
  %s3 = inlined_call_operand.vmem [shape: bf16[1024,256], index: 3, kind: input, shape index: {}]
  %s4 = inlined_call_operand.hbm [shape: bf16[256,128], index: 4, kind: input, shape index: {}]
  %s5 = inlined_call_operand.hbm [shape: bf16[128,256], index: 5, kind: input, shape index: {}]
  %s6 = inlined_call_operand.vmem [shape: bf16[256,256], index: 6, kind: input, shape index: {}]
  %s7 = inlined_call_operand.hbm [shape: bf16[768,256], index: 7, kind: input, shape index: {}]
  %s8 = inlined_call_operand.vmem [shape: f32[8,256], index: 8, kind: output, shape index: {0}]
  %s9 = inlined_call_operand.vmem [shape: f32[8,128], index: 9, kind: output, shape index: {1}]
  %10 = xla_tuple %s8, %s9
  %s11 = sld [smem:[#allocation0]]
  $region62: #{fwd.1} parent=0
    _
  %s13 = ssub.s32 1, %s11
  %s14 = scalar_select 0, %s13, %s11
  $region1: #{fwd.1} parent=0
    #allocation2 [shape = 'u8[65536]{0}', space=vmem, size = 0x10000, scoped, tag = 'input window, operand 4, single buffered']
    #allocation3 [shape = 's32[1]{0}', space=sflag, size = 0x4, scoped, tag = 'scoped memory for fwd.1']
    #allocation4 [shape = 'u8[65536]{0}', space=vmem, size = 0x10000, scoped, tag = 'input window, operand 5, single buffered']
    #allocation5 [shape = 's32[1]{0}', space=sflag, size = 0x4, scoped, tag = 'scoped memory for fwd.1']
    #allocation6 [shape = 'u8[393216]{0}', space=vmem, size = 0x60000, scoped, tag = 'input window, operand 7, single buffered']
    %15 = vsyncpa [#allocation3], 0
    %16 = vsyncpa [#allocation5], 0
    // Predicated region
    $region2: #{fwd.1} parent=1 // pred_check
      _
    $region3: #{fwd.1} parent=1 // pred_check_branch
      %18 = sbr.rel (0) target = $region5
    $region4: #{fwd.1} parent=1 // pred_region
      _
    $region5: #{fwd.1} parent=1 // pred_fallthru
      _
    // Predicated region
    $region6: #{fwd.1} parent=1 // pred_check
      _
    $region7: #{fwd.1} parent=1 // pred_check_branch
      %20 = sbr.rel (0) target = $region9
    $region8: #{fwd.1} parent=1 // pred_region
      _
    $region9: #{fwd.1} parent=1 // pred_fallthru
      _
    // Predicated region
    $region10: #{fwd.1} parent=1 // pred_check
      _
    $region11: #{fwd.1} parent=1 // pred_check_branch
      %22 = sbr.rel (0) target = $region13
    $region12: #{fwd.1} parent=1 // pred_region
      _
    $region13: #{fwd.1} parent=1 // pred_fallthru
      _
    // Predicated region
    $region14: #{fwd.1} parent=1 // pred_check
      _
    $region15: #{fwd.1} parent=1 // pred_check_branch
      %24 = sbr.rel (0) target = $region17
    $region16: #{fwd.1} parent=1 // pred_region
      _
    $region17: #{fwd.1} parent=1 // pred_fallthru
      _
    // Predicated region
    $region18: #{fwd.1} parent=1 // pred_check
      _
    $region19: #{fwd.1} parent=1 // pred_check_branch
      %26 = sbr.rel (0) target = $region21
    $region20: #{fwd.1} parent=1 // pred_region
      %28 = vsyncadd [#allocation3], 0
      %s29 = sshll.u32 %s4, 4
      %s30 = int_to_ptr.hbm [resolvable:$true] %s29
      %s31 = sshll.u32 [#allocation2], 4
      %s32 = int_to_ptr.vmem [resolvable:$true] %s31
      %37 = dma.hbm_to_vmem [thread:$0]  %s30, 2048, %s32, [#allocation3], 64, 64, 4
    $region21: #{fwd.1} parent=1 // pred_fallthru
      _
    // Predicated region
    $region22: #{fwd.1} parent=1 // pred_check
      _
    $region23: #{fwd.1} parent=1 // pred_check_branch
      %39 = sbr.rel (0) target = $region25
    $region24: #{fwd.1} parent=1 // pred_region
      %41 = vsyncadd [#allocation5], 0
      %s42 = sshll.u32 %s5, 4
      %s43 = int_to_ptr.hbm [resolvable:$true] %s42
      %s44 = sshll.u32 [#allocation4], 4
      %s45 = int_to_ptr.vmem [resolvable:$true] %s44
      %50 = dma.hbm_to_vmem [thread:$0]  %s43, 2048, %s45, [#allocation5], 128, 128, 8
    $region25: #{fwd.1} parent=1 // pred_fallthru
      _
    // Predicated region
    $region26: #{fwd.1} parent=1 // pred_check
      _
    $region27: #{fwd.1} parent=1 // pred_check_branch
      %52 = sbr.rel (0) target = $region29
    $region28: #{fwd.1} parent=1 // pred_region
      _
    $region29: #{fwd.1} parent=1 // pred_fallthru
      _
    // Predicated region
    $region30: #{fwd.1} parent=1 // pred_check
      _
    $region31: #{fwd.1} parent=1 // pred_check_branch
      %54 = sbr.rel (0) target = $region33
    $region32: #{fwd.1} parent=1 // pred_region
      %56 = vsyncadd [#allocation5], 0
      %s57 = sshll.u32 %s7, 4
      %s58 = int_to_ptr.hbm [resolvable:$true] %s57
      %s59 = sshll.u32 [#allocation6], 4
      %s60 = int_to_ptr.vmem [resolvable:$true] %s59
      %65 = dma.hbm_to_vmem [thread:$0]  %s58, 12288, %s60, [#allocation5], 128, 128, 8
    $region33: #{fwd.1} parent=1 // pred_fallthru
      _
    // Predicated region
    $region34: #{fwd.1} parent=1 // pred_check
      _
    $region35: #{fwd.1} parent=1 // pred_check_branch
      %67 = sbr.rel (0) target = $region37
    $region36: #{fwd.1} parent=1 // pred_region
      %69 = dma.done [#allocation3], 2048
    $region37: #{fwd.1} parent=1 // pred_fallthru
      _
    // Predicated region
    $region38: #{fwd.1} parent=1 // pred_check
      _
    $region39: #{fwd.1} parent=1 // pred_check_branch
      %71 = sbr.rel (0) target = $region41
    $region40: #{fwd.1} parent=1 // pred_region
      %73 = dma.done [#allocation5], 2048
    $region41: #{fwd.1} parent=1 // pred_fallthru
      _
    // Predicated region
    $region42: #{fwd.1} parent=1 // pred_check
      _
    $region43: #{fwd.1} parent=1 // pred_check_branch
      %75 = sbr.rel (0) target = $region45
    $region44: #{fwd.1} parent=1 // pred_region
      %77 = dma.done [#allocation5], 12288
    $region45: #{fwd.1} parent=1 // pred_fallthru
      _
    %v79 = vld [vmem:[%s1 + $0x30] sm:$0xff]
    %v80 = vld [vmem:[#allocation6 + $0x160] sm:$0xf]
    %v81 = vld [vmem:[#allocation6 + $0x168] sm:$0xf]
    %v82 = vld [vmem:[#allocation6 + $0x170] sm:$0xf]
    %v83 = vld [vmem:[#allocation6 + $0x178] sm:$0xf]
    %v84 = vld [vmem:[#allocation6 + $0x180] sm:$0xf]
    %v85 = vld [vmem:[#allocation6 + $0x188] sm:$0xf]
    %v86 = vld [vmem:[#allocation6 + $0x190] sm:$0xf]
    %v87 = vld [vmem:[#allocation6 + $0x198] sm:$0xf]
    %v88 = vld [vmem:[#allocation6 + $0x1a0] sm:$0xf]
    %v89 = vld [vmem:[#allocation6 + $0x1a8] sm:$0xf]
    %v90 = vld [vmem:[#allocation6 + $0x1b0] sm:$0xf]
    %v91 = vld [vmem:[#allocation6 + $0x1b8] sm:$0xf]
    %v92 = vld [vmem:[#allocation6 + $0x1c0] sm:$0xf]
    %v93 = vld [vmem:[#allocation6 + $0x1c8] sm:$0xf]
    %v94 = vld [vmem:[#allocation6 + $0x1d0] sm:$0xf]
    %v95 = vld [vmem:[#allocation6 + $0x1d8] sm:$0xf]
    %v96 = vld [vmem:[#allocation6 + $0x1e0] sm:$0xf]
    %v97 = vld [vmem:[#allocation6 + $0x1e8] sm:$0xf]
    %v98 = vld [vmem:[#allocation6 + $0x1f0] sm:$0xf]
    %v99 = vld [vmem:[#allocation6 + $0x1f8] sm:$0xf]
    %v100 = vld [vmem:[#allocation6 + $0x200] sm:$0xf]
    %v101 = vld [vmem:[#allocation6 + $0x208] sm:$0xf]
    %v102 = vld [vmem:[#allocation6 + $0x210] sm:$0xf]
    %v103 = vld [vmem:[#allocation6 + $0x218] sm:$0xf]
    %v104 = vld [vmem:[#allocation6 + $0x220] sm:$0xf]
    %v105 = vld [vmem:[#allocation6 + $0x228] sm:$0xf]
    %v106 = vld [vmem:[#allocation6 + $0x230] sm:$0xf]
    %v107 = vld [vmem:[#allocation6 + $0x238] sm:$0xf]
    %v108 = vld [vmem:[#allocation6 + $0x240] sm:$0xf]
    %v109 = vld [vmem:[#allocation6 + $0x248] sm:$0xf]
    %v110 = vld [vmem:[#allocation6 + $0x250] sm:$0xf]
    %v111 = vld [vmem:[#allocation6 + $0x258] sm:$0xf]
    %v112 = vld [vmem:[#allocation6 + $0x260] sm:$0x33]
    %v113 = vld [vmem:[#allocation6 + $0x270] sm:$0xf]
    %v114 = vld [vmem:[#allocation6 + $0x278] sm:$0xf]
    %v115 = vld [vmem:[#allocation6 + $0x280] sm:$0xf]
    %v116 = vld [vmem:[#allocation6 + $0x288] sm:$0xf]
    %v117 = vld [vmem:[#allocation6 + $0x290] sm:$0xf]
    %v118 = vld [vmem:[#allocation6 + $0x298] sm:$0xf]
    %v119 = vld [vmem:[#allocation6 + $0x2a0] sm:$0xf]
    %v120 = vld [vmem:[#allocation6 + $0x2a8] sm:$0xf]
    %v121 = vld [vmem:[#allocation6 + $0x2b0] sm:$0xf]
    %v122 = vld [vmem:[#allocation6 + $0x2b8] sm:$0xf]
    %v123 = vld [vmem:[#allocation6 + $0x2c0] sm:$0xf]
    %v124 = vld [vmem:[#allocation6 + $0x2c8] sm:$0xf]
    %v125 = vld [vmem:[#allocation6 + $0x2d0] sm:$0xf]
    %v126 = vld [vmem:[#allocation6 + $0x2d8] sm:$0xf]
    %v127 = vld [vmem:[#allocation6 + $0x2e0] sm:$0xf]
    %v128 = vld [vmem:[#allocation6 + $0x2e8] sm:$0xf]
    %v129 = vld [vmem:[#allocation6 + $0x2f0] sm:$0xf]
    %v130 = vld [vmem:[%s0] sm:$0xff]
    %v131 = vld [vmem:[%s0 + $0x8] sm:$0xff]
    %v132 = vld [vmem:[%s0 + $0x10] sm:$0xff]
    %v133 = vld [vmem:[%s0 + $0x18] sm:$0xff]
    %v134 = vld [vmem:[%s0 + $0x20] sm:$0xff]
    %v135 = vld [vmem:[%s0 + $0x28] sm:$0xff]
    %v136 = vld [vmem:[%s0 + $0x30] sm:$0xff]
    %v137 = vld [vmem:[%s0 + $0x38] sm:$0xff]
    %v138 = vld [vmem:[%s3] sm:$0xff]
    %v139 = vld [vmem:[%s3 + $0x8] sm:$0xff]
    %v140 = vld [vmem:[%s3 + $0x10] sm:$0xff]
    %v141 = vld [vmem:[%s3 + $0x18] sm:$0xff]
    %v142 = vld [vmem:[%s3 + $0x20] sm:$0xff]
    %v143 = vld [vmem:[%s3 + $0x28] sm:$0xff]
    %v144 = vld [vmem:[%s3 + $0x30] sm:$0xff]
    %v145 = vld [vmem:[%s3 + $0x38] sm:$0xff]
    %v146 = vld [vmem:[%s3 + $0x40] sm:$0xff]
    %v147 = vld [vmem:[%s3 + $0x48] sm:$0xff]
    %v148 = vld [vmem:[%s3 + $0x50] sm:$0xff]
    %v149 = vld [vmem:[%s3 + $0x58] sm:$0xff]
    %v150 = vld [vmem:[%s3 + $0x60] sm:$0xff]
    %v151 = vld [vmem:[%s3 + $0x68] sm:$0xff]
    %v152 = vld [vmem:[%s3 + $0x70] sm:$0xff]
    %v153 = vld [vmem:[%s3 + $0x78] sm:$0xff]
    %v154 = vld [vmem:[%s3 + $0x80] sm:$0xff]
    %v155 = vld [vmem:[%s3 + $0x88] sm:$0xff]
    %v156 = vld [vmem:[%s3 + $0x90] sm:$0xff]
    %v157 = vld [vmem:[%s3 + $0x98] sm:$0xff]
    %v158 = vld [vmem:[%s3 + $0xa0] sm:$0xff]
    %v159 = vld [vmem:[%s3 + $0xa8] sm:$0xff]
    %v160 = vld [vmem:[%s3 + $0xb0] sm:$0xff]
    %v161 = vld [vmem:[%s3 + $0xb8] sm:$0xff]
    %v162 = vld [vmem:[%s3 + $0xc0] sm:$0xff]
    %v163 = vld [vmem:[%s3 + $0xc8] sm:$0xff]
    %v164 = vld [vmem:[%s3 + $0xd0] sm:$0xff]
    %v165 = vld [vmem:[%s3 + $0xd8] sm:$0xff]
    %v166 = vld [vmem:[%s3 + $0xe0] sm:$0xff]
    %v167 = vld [vmem:[%s3 + $0xe8] sm:$0xff]
    %v168 = vld [vmem:[%s3 + $0xf0] sm:$0xff]
    %v169 = vld [vmem:[%s3 + $0xf8] sm:$0xff]
    %v170 = vld [vmem:[%s3 + $0x100] sm:$0xff]
    %v171 = vld [vmem:[%s3 + $0x108] sm:$0xff]
    %v172 = vld [vmem:[%s3 + $0x110] sm:$0xff]
    %v173 = vld [vmem:[%s3 + $0x118] sm:$0xff]
    %v174 = vld [vmem:[%s3 + $0x120] sm:$0xff]
    %v175 = vld [vmem:[%s3 + $0x128] sm:$0xff]
    %v176 = vld [vmem:[%s3 + $0x130] sm:$0xff]
    %v177 = vld [vmem:[%s3 + $0x138] sm:$0xff]
    %v178 = vld [vmem:[%s3 + $0x140] sm:$0xff]
    %v179 = vld [vmem:[%s3 + $0x148] sm:$0xff]
    %v180 = vld [vmem:[%s3 + $0x150] sm:$0xff]
    %v181 = vld [vmem:[%s3 + $0x158] sm:$0xff]
    %v182 = vld [vmem:[%s3 + $0x160] sm:$0xff]
    %v183 = vld [vmem:[%s3 + $0x168] sm:$0xff]
    %v184 = vld [vmem:[%s3 + $0x170] sm:$0xff]
    %v185 = vld [vmem:[%s3 + $0x178] sm:$0xff]
    %v186 = vld [vmem:[%s3 + $0x180] sm:$0xff]
    %v187 = vld [vmem:[%s3 + $0x188] sm:$0xff]
    %v188 = vld [vmem:[%s3 + $0x190] sm:$0xff]
    %v189 = vld [vmem:[%s3 + $0x198] sm:$0xff]
    %v190 = vld [vmem:[%s3 + $0x1a0] sm:$0xff]
    %v191 = vld [vmem:[%s3 + $0x1a8] sm:$0xff]
    %v192 = vld [vmem:[%s3 + $0x1b0] sm:$0xff]
    %v193 = vld [vmem:[%s3 + $0x1b8] sm:$0xff]
    %v194 = vld [vmem:[%s3 + $0x1c0] sm:$0xff]
    %v195 = vld [vmem:[%s3 + $0x1c8] sm:$0xff]
    %v196 = vld [vmem:[%s3 + $0x1d0] sm:$0xff]
    %v197 = vld [vmem:[%s3 + $0x1d8] sm:$0xff]
    %v198 = vld [vmem:[%s3 + $0x1e0] sm:$0xff]
    %v199 = vld [vmem:[%s3 + $0x1e8] sm:$0xff]
    %v200 = vld [vmem:[%s3 + $0x1f0] sm:$0xff]
    %v201 = vld [vmem:[%s3 + $0x1f8] sm:$0xff]
    %v202 = vld [vmem:[%s3 + $0x200] sm:$0xff]
    %v203 = vld [vmem:[%s3 + $0x208] sm:$0xff]
    %v204 = vld [vmem:[%s3 + $0x210] sm:$0xff]
    %v205 = vld [vmem:[%s3 + $0x218] sm:$0xff]
    %v206 = vld [vmem:[%s3 + $0x220] sm:$0xff]
    %v207 = vld [vmem:[%s3 + $0x228] sm:$0xff]
    %v208 = vld [vmem:[%s3 + $0x230] sm:$0xff]
    %v209 = vld [vmem:[%s3 + $0x238] sm:$0xff]
    %v210 = vld [vmem:[%s3 + $0x240] sm:$0xff]
    %v211 = vld [vmem:[%s3 + $0x248] sm:$0xff]
    %v212 = vld [vmem:[%s3 + $0x250] sm:$0xff]
    %v213 = vld [vmem:[%s3 + $0x258] sm:$0xff]
    %v214 = vld [vmem:[%s3 + $0x260] sm:$0xff]
    %v215 = vld [vmem:[%s3 + $0x268] sm:$0xff]
    %v216 = vld [vmem:[%s3 + $0x270] sm:$0xff]
    %v217 = vld [vmem:[%s3 + $0x278] sm:$0xff]
    %v218 = vld [vmem:[%s3 + $0x280] sm:$0xff]
    %v219 = vld [vmem:[%s3 + $0x288] sm:$0xff]
    %v220 = vld [vmem:[%s3 + $0x290] sm:$0xff]
    %v221 = vld [vmem:[%s3 + $0x298] sm:$0xff]
    %v222 = vld [vmem:[%s3 + $0x2a0] sm:$0xff]
    %v223 = vld [vmem:[%s3 + $0x2a8] sm:$0xff]
    %v224 = vld [vmem:[%s3 + $0x2b0] sm:$0xff]
    %v225 = vld [vmem:[%s3 + $0x2b8] sm:$0xff]
    %v226 = vld [vmem:[%s3 + $0x2c0] sm:$0xff]
    %v227 = vld [vmem:[%s3 + $0x2c8] sm:$0xff]
    %v228 = vld [vmem:[%s3 + $0x2d0] sm:$0xff]
    %v229 = vld [vmem:[%s3 + $0x2d8] sm:$0xff]
    %v230 = vld [vmem:[%s3 + $0x2e0] sm:$0xff]
    %v231 = vld [vmem:[%s3 + $0x2e8] sm:$0xff]
    %v232 = vld [vmem:[%s3 + $0x2f0] sm:$0xff]
    %v233 = vld [vmem:[%s3 + $0x2f8] sm:$0xff]
    %v234 = vld [vmem:[%s3 + $0x300] sm:$0xff]
    %v235 = vld [vmem:[%s3 + $0x308] sm:$0xff]
    %v236 = vld [vmem:[%s3 + $0x310] sm:$0xff]
    %v237 = vld [vmem:[%s3 + $0x318] sm:$0xff]
    %v238 = vld [vmem:[%s3 + $0x320] sm:$0xff]
    %v239 = vld [vmem:[%s3 + $0x328] sm:$0xff]
    %v240 = vld [vmem:[%s3 + $0x330] sm:$0xff]
    %v241 = vld [vmem:[%s3 + $0x338] sm:$0xff]
    %v242 = vld [vmem:[%s3 + $0x340] sm:$0xff]
    %v243 = vld [vmem:[%s3 + $0x348] sm:$0xff]
    %v244 = vld [vmem:[%s3 + $0x350] sm:$0xff]
    %v245 = vld [vmem:[%s3 + $0x358] sm:$0xff]
    %v246 = vld [vmem:[%s3 + $0x360] sm:$0xff]
    %v247 = vld [vmem:[%s3 + $0x368] sm:$0xff]
    %v248 = vld [vmem:[%s3 + $0x370] sm:$0xff]
    %v249 = vld [vmem:[%s3 + $0x378] sm:$0xff]
    %v250 = vld [vmem:[%s3 + $0x380] sm:$0xff]
    %v251 = vld [vmem:[%s3 + $0x388] sm:$0xff]
    %v252 = vld [vmem:[%s3 + $0x390] sm:$0xff]
    %v253 = vld [vmem:[%s3 + $0x398] sm:$0xff]
    %v254 = vld [vmem:[%s3 + $0x3a0] sm:$0xff]
    %v255 = vld [vmem:[%s3 + $0x3a8] sm:$0xff]
    %v256 = vld [vmem:[%s3 + $0x3b0] sm:$0xff]
    %v257 = vld [vmem:[%s3 + $0x3b8] sm:$0xff]
    %v258 = vld [vmem:[%s3 + $0x3c0] sm:$0xff]
    %v259 = vld [vmem:[%s3 + $0x3c8] sm:$0xff]
    %v260 = vld [vmem:[%s3 + $0x3d0] sm:$0xff]
    %v261 = vld [vmem:[%s3 + $0x3d8] sm:$0xff]
    %v262 = vld [vmem:[%s3 + $0x3e0] sm:$0xff]
    %v263 = vld [vmem:[%s3 + $0x3e8] sm:$0xff]
    %v264 = vld [vmem:[%s3 + $0x3f0] sm:$0xff]
    %v265 = vld [vmem:[%s3 + $0x3f8] sm:$0xff]
    %v266 = vpack.c.bf16 %v130, %v130
    %v267 = vpack.c.bf16 %v131, %v131
    %v268 = vpack.c.bf16 %v132, %v132
    %v269 = vpack.c.bf16 %v133, %v133
    %v270 = vpack.c.bf16 %v134, %v134
    %v271 = vpack.c.bf16 %v135, %v135
    %v272 = vpack.c.bf16 %v136, %v136
    %v273 = vpack.c.bf16 %v137, %v137
    %v274 = vld [vmem:[%s2] ss:$8 sm:$0x3]
    %v276 = vperm.slane %v274, 0
    %v277 = vperm.slane %v274, 1
    %v408 = vunpack.c.l.b16 %v138
    %v409 = vunpack.c.h.b16 %v138
    %v410 = vunpack.c.l.b16 %v139
    %v411 = vunpack.c.h.b16 %v139
    %v412 = vunpack.c.l.b16 %v140
    %v413 = vunpack.c.h.b16 %v140
    %v414 = vunpack.c.l.b16 %v141
    %v415 = vunpack.c.h.b16 %v141
    %v416 = vunpack.c.l.b16 %v142
    %v417 = vunpack.c.h.b16 %v142
    %v418 = vunpack.c.l.b16 %v143
    %v419 = vunpack.c.h.b16 %v143
    %v420 = vunpack.c.l.b16 %v144
    %v421 = vunpack.c.h.b16 %v144
    %v422 = vunpack.c.l.b16 %v145
    %v423 = vunpack.c.h.b16 %v145
    %v424 = vunpack.c.l.b16 %v146
    %v425 = vunpack.c.h.b16 %v146
    %v426 = vunpack.c.l.b16 %v147
    %v427 = vunpack.c.h.b16 %v147
    %v428 = vunpack.c.l.b16 %v148
    %v429 = vunpack.c.h.b16 %v148
    %v430 = vunpack.c.l.b16 %v149
    %v431 = vunpack.c.h.b16 %v149
    %v432 = vunpack.c.l.b16 %v150
    %v433 = vunpack.c.h.b16 %v150
    %v434 = vunpack.c.l.b16 %v151
    %v435 = vunpack.c.h.b16 %v151
    %v436 = vunpack.c.l.b16 %v152
    %v437 = vunpack.c.h.b16 %v152
    %v438 = vunpack.c.l.b16 %v153
    %v439 = vunpack.c.h.b16 %v153
    %v440 = vunpack.c.l.b16 %v154
    %v441 = vunpack.c.h.b16 %v154
    %v442 = vunpack.c.l.b16 %v155
    %v443 = vunpack.c.h.b16 %v155
    %v444 = vunpack.c.l.b16 %v156
    %v445 = vunpack.c.h.b16 %v156
    %v446 = vunpack.c.l.b16 %v157
    %v447 = vunpack.c.h.b16 %v157
    %v448 = vunpack.c.l.b16 %v158
    %v449 = vunpack.c.h.b16 %v158
    %v450 = vunpack.c.l.b16 %v159
    %v451 = vunpack.c.h.b16 %v159
    %v452 = vunpack.c.l.b16 %v160
    %v453 = vunpack.c.h.b16 %v160
    %v454 = vunpack.c.l.b16 %v161
    %v455 = vunpack.c.h.b16 %v161
    %v456 = vunpack.c.l.b16 %v162
    %v457 = vunpack.c.h.b16 %v162
    %v458 = vunpack.c.l.b16 %v163
    %v459 = vunpack.c.h.b16 %v163
    %v460 = vunpack.c.l.b16 %v164
    %v461 = vunpack.c.h.b16 %v164
    %v462 = vunpack.c.l.b16 %v165
    %v463 = vunpack.c.h.b16 %v165
    %v464 = vunpack.c.l.b16 %v166
    %v465 = vunpack.c.h.b16 %v166
    %v466 = vunpack.c.l.b16 %v167
    %v467 = vunpack.c.h.b16 %v167
    %v468 = vunpack.c.l.b16 %v168
    %v469 = vunpack.c.h.b16 %v168
    %v470 = vunpack.c.l.b16 %v169
    %v471 = vunpack.c.h.b16 %v169
    %v472 = vunpack.c.l.b16 %v170
    %v473 = vunpack.c.h.b16 %v170
    %v474 = vunpack.c.l.b16 %v171
    %v475 = vunpack.c.h.b16 %v171
    %v476 = vunpack.c.l.b16 %v172
    %v477 = vunpack.c.h.b16 %v172
    %v478 = vunpack.c.l.b16 %v173
    %v479 = vunpack.c.h.b16 %v173
    %v480 = vunpack.c.l.b16 %v174
    %v481 = vunpack.c.h.b16 %v174
    %v482 = vunpack.c.l.b16 %v175
    %v483 = vunpack.c.h.b16 %v175
    %v484 = vunpack.c.l.b16 %v176
    %v485 = vunpack.c.h.b16 %v176
    %v486 = vunpack.c.l.b16 %v177
    %v487 = vunpack.c.h.b16 %v177
    %v488 = vunpack.c.l.b16 %v178
    %v489 = vunpack.c.h.b16 %v178
    %v490 = vunpack.c.l.b16 %v179
    %v491 = vunpack.c.h.b16 %v179
    %v492 = vunpack.c.l.b16 %v180
    %v493 = vunpack.c.h.b16 %v180
    %v494 = vunpack.c.l.b16 %v181
    %v495 = vunpack.c.h.b16 %v181
    %v496 = vunpack.c.l.b16 %v182
    %v497 = vunpack.c.h.b16 %v182
    %v498 = vunpack.c.l.b16 %v183
    %v499 = vunpack.c.h.b16 %v183
    %v500 = vunpack.c.l.b16 %v184
    %v501 = vunpack.c.h.b16 %v184
    %v502 = vunpack.c.l.b16 %v185
    %v503 = vunpack.c.h.b16 %v185
    %v504 = vunpack.c.l.b16 %v186
    %v505 = vunpack.c.h.b16 %v186
    %v506 = vunpack.c.l.b16 %v187
    %v507 = vunpack.c.h.b16 %v187
    %v508 = vunpack.c.l.b16 %v188
    %v509 = vunpack.c.h.b16 %v188
    %v510 = vunpack.c.l.b16 %v189
    %v511 = vunpack.c.h.b16 %v189
    %v512 = vunpack.c.l.b16 %v190
    %v513 = vunpack.c.h.b16 %v190
    %v514 = vunpack.c.l.b16 %v191
    %v515 = vunpack.c.h.b16 %v191
    %v516 = vunpack.c.l.b16 %v192
    %v517 = vunpack.c.h.b16 %v192
    %v518 = vunpack.c.l.b16 %v193
    %v519 = vunpack.c.h.b16 %v193
    %v520 = vunpack.c.l.b16 %v194
    %v521 = vunpack.c.h.b16 %v194
    %v522 = vunpack.c.l.b16 %v195
    %v523 = vunpack.c.h.b16 %v195
    %v524 = vunpack.c.l.b16 %v196
    %v525 = vunpack.c.h.b16 %v196
    %v526 = vunpack.c.l.b16 %v197
    %v527 = vunpack.c.h.b16 %v197
    %v528 = vunpack.c.l.b16 %v198
    %v529 = vunpack.c.h.b16 %v198
    %v530 = vunpack.c.l.b16 %v199
    %v531 = vunpack.c.h.b16 %v199
    %v532 = vunpack.c.l.b16 %v200
    %v533 = vunpack.c.h.b16 %v200
    %v534 = vunpack.c.l.b16 %v201
    %v535 = vunpack.c.h.b16 %v201
    %v536 = vunpack.c.l.b16 %v202
    %v537 = vunpack.c.h.b16 %v202
    %v538 = vunpack.c.l.b16 %v203
    %v539 = vunpack.c.h.b16 %v203
    %v540 = vunpack.c.l.b16 %v204
    %v541 = vunpack.c.h.b16 %v204
    %v542 = vunpack.c.l.b16 %v205
    %v543 = vunpack.c.h.b16 %v205
    %v544 = vunpack.c.l.b16 %v206
    %v545 = vunpack.c.h.b16 %v206
    %v546 = vunpack.c.l.b16 %v207
    %v547 = vunpack.c.h.b16 %v207
    %v548 = vunpack.c.l.b16 %v208
    %v549 = vunpack.c.h.b16 %v208
    %v550 = vunpack.c.l.b16 %v209
    %v551 = vunpack.c.h.b16 %v209
    %v552 = vunpack.c.l.b16 %v210
    %v553 = vunpack.c.h.b16 %v210
    %v554 = vunpack.c.l.b16 %v211
    %v555 = vunpack.c.h.b16 %v211
    %v556 = vunpack.c.l.b16 %v212
    %v557 = vunpack.c.h.b16 %v212
    %v558 = vunpack.c.l.b16 %v213
    %v559 = vunpack.c.h.b16 %v213
    %v560 = vunpack.c.l.b16 %v214
    %v561 = vunpack.c.h.b16 %v214
    %v562 = vunpack.c.l.b16 %v215
    %v563 = vunpack.c.h.b16 %v215
    %v564 = vunpack.c.l.b16 %v216
    %v565 = vunpack.c.h.b16 %v216
    %v566 = vunpack.c.l.b16 %v217
    %v567 = vunpack.c.h.b16 %v217
    %v568 = vunpack.c.l.b16 %v218
    %v569 = vunpack.c.h.b16 %v218
    %v570 = vunpack.c.l.b16 %v219
    %v571 = vunpack.c.h.b16 %v219
    %v572 = vunpack.c.l.b16 %v220
    %v573 = vunpack.c.h.b16 %v220
    %v574 = vunpack.c.l.b16 %v221
    %v575 = vunpack.c.h.b16 %v221
    %v576 = vunpack.c.l.b16 %v222
    %v577 = vunpack.c.h.b16 %v222
    %v578 = vunpack.c.l.b16 %v223
    %v579 = vunpack.c.h.b16 %v223
    %v580 = vunpack.c.l.b16 %v224
    %v581 = vunpack.c.h.b16 %v224
    %v582 = vunpack.c.l.b16 %v225
    %v583 = vunpack.c.h.b16 %v225
    %v584 = vunpack.c.l.b16 %v226
    %v585 = vunpack.c.h.b16 %v226
    %v586 = vunpack.c.l.b16 %v227
    %v587 = vunpack.c.h.b16 %v227
    %v588 = vunpack.c.l.b16 %v228
    %v589 = vunpack.c.h.b16 %v228
    %v590 = vunpack.c.l.b16 %v229
    %v591 = vunpack.c.h.b16 %v229
    %v592 = vunpack.c.l.b16 %v230
    %v593 = vunpack.c.h.b16 %v230
    %v594 = vunpack.c.l.b16 %v231
    %v595 = vunpack.c.h.b16 %v231
    %v596 = vunpack.c.l.b16 %v232
    %v597 = vunpack.c.h.b16 %v232
    %v598 = vunpack.c.l.b16 %v233
    %v599 = vunpack.c.h.b16 %v233
    %v600 = vunpack.c.l.b16 %v234
    %v601 = vunpack.c.h.b16 %v234
    %v602 = vunpack.c.l.b16 %v235
    %v603 = vunpack.c.h.b16 %v235
    %v604 = vunpack.c.l.b16 %v236
    %v605 = vunpack.c.h.b16 %v236
    %v606 = vunpack.c.l.b16 %v237
    %v607 = vunpack.c.h.b16 %v237
    %v608 = vunpack.c.l.b16 %v238
    %v609 = vunpack.c.h.b16 %v238
    %v610 = vunpack.c.l.b16 %v239
    %v611 = vunpack.c.h.b16 %v239
    %v612 = vunpack.c.l.b16 %v240
    %v613 = vunpack.c.h.b16 %v240
    %v614 = vunpack.c.l.b16 %v241
    %v615 = vunpack.c.h.b16 %v241
    %v616 = vunpack.c.l.b16 %v242
    %v617 = vunpack.c.h.b16 %v242
    %v618 = vunpack.c.l.b16 %v243
    %v619 = vunpack.c.h.b16 %v243
    %v620 = vunpack.c.l.b16 %v244
    %v621 = vunpack.c.h.b16 %v244
    %v622 = vunpack.c.l.b16 %v245
    %v623 = vunpack.c.h.b16 %v245
    %v624 = vunpack.c.l.b16 %v246
    %v625 = vunpack.c.h.b16 %v246
    %v626 = vunpack.c.l.b16 %v247
    %v627 = vunpack.c.h.b16 %v247
    %v628 = vunpack.c.l.b16 %v248
    %v629 = vunpack.c.h.b16 %v248
    %v630 = vunpack.c.l.b16 %v249
    %v631 = vunpack.c.h.b16 %v249
    %v632 = vunpack.c.l.b16 %v250
    %v633 = vunpack.c.h.b16 %v250
    %v634 = vunpack.c.l.b16 %v251
    %v635 = vunpack.c.h.b16 %v251
    %v636 = vunpack.c.l.b16 %v252
    %v637 = vunpack.c.h.b16 %v252
    %v638 = vunpack.c.l.b16 %v253
    %v639 = vunpack.c.h.b16 %v253
    %v640 = vunpack.c.l.b16 %v254
    %v641 = vunpack.c.h.b16 %v254
    %v642 = vunpack.c.l.b16 %v255
    %v643 = vunpack.c.h.b16 %v255
    %v644 = vunpack.c.l.b16 %v256
    %v645 = vunpack.c.h.b16 %v256
    %v646 = vunpack.c.l.b16 %v257
    %v647 = vunpack.c.h.b16 %v257
    %v648 = vunpack.c.l.b16 %v258
    %v649 = vunpack.c.h.b16 %v258
    %v650 = vunpack.c.l.b16 %v259
    %v651 = vunpack.c.h.b16 %v259
    %v652 = vunpack.c.l.b16 %v260
    %v653 = vunpack.c.h.b16 %v260
    %v654 = vunpack.c.l.b16 %v261
    %v655 = vunpack.c.h.b16 %v261
    %v656 = vunpack.c.l.b16 %v262
    %v657 = vunpack.c.h.b16 %v262
    %v658 = vunpack.c.l.b16 %v263
    %v659 = vunpack.c.h.b16 %v263
    %v660 = vunpack.c.l.b16 %v264
    %v661 = vunpack.c.h.b16 %v264
    %v662 = vunpack.c.l.b16 %v265
    %v663 = vunpack.c.h.b16 %v265
    %v664 = vpack.c.b16 %v410, %v408
    %v665 = vpack.c.b16 %v411, %v409
    %v666 = vpack.c.b16 %v414, %v412
    %v667 = vpack.c.b16 %v415, %v413
    %v668 = vpack.c.b16 %v418, %v416
    %v669 = vpack.c.b16 %v419, %v417
    %v670 = vpack.c.b16 %v422, %v420
    %v671 = vpack.c.b16 %v423, %v421
    %v672 = vpack.c.b16 %v426, %v424
    %v673 = vpack.c.b16 %v427, %v425
    %v674 = vpack.c.b16 %v430, %v428
    %v675 = vpack.c.b16 %v431, %v429
    %v676 = vpack.c.b16 %v434, %v432
    %v677 = vpack.c.b16 %v435, %v433
    %v678 = vpack.c.b16 %v438, %v436
    %v679 = vpack.c.b16 %v439, %v437
    %v680 = vpack.c.b16 %v442, %v440
    %v681 = vpack.c.b16 %v443, %v441
    %v682 = vpack.c.b16 %v446, %v444
    %v683 = vpack.c.b16 %v447, %v445
    %v684 = vpack.c.b16 %v450, %v448
    %v685 = vpack.c.b16 %v451, %v449
    %v686 = vpack.c.b16 %v454, %v452
    %v687 = vpack.c.b16 %v455, %v453
    %v688 = vpack.c.b16 %v458, %v456
    %v689 = vpack.c.b16 %v459, %v457
    %v690 = vpack.c.b16 %v462, %v460
    %v691 = vpack.c.b16 %v463, %v461
    %v692 = vpack.c.b16 %v466, %v464
    %v693 = vpack.c.b16 %v467, %v465
    %v694 = vpack.c.b16 %v470, %v468
    %v695 = vpack.c.b16 %v471, %v469
    %v696 = vpack.c.b16 %v474, %v472
    %v697 = vpack.c.b16 %v475, %v473
    %v698 = vpack.c.b16 %v478, %v476
    %v699 = vpack.c.b16 %v479, %v477
    %v700 = vpack.c.b16 %v482, %v480
    %v701 = vpack.c.b16 %v483, %v481
    %v702 = vpack.c.b16 %v486, %v484
    %v703 = vpack.c.b16 %v487, %v485
    %v704 = vpack.c.b16 %v490, %v488
    %v705 = vpack.c.b16 %v491, %v489
    %v706 = vpack.c.b16 %v494, %v492
    %v707 = vpack.c.b16 %v495, %v493
    %v708 = vpack.c.b16 %v498, %v496
    %v709 = vpack.c.b16 %v499, %v497
    %v710 = vpack.c.b16 %v502, %v500
    %v711 = vpack.c.b16 %v503, %v501
    %v712 = vpack.c.b16 %v506, %v504
    %v713 = vpack.c.b16 %v507, %v505
    %v714 = vpack.c.b16 %v510, %v508
    %v715 = vpack.c.b16 %v511, %v509
    %v716 = vpack.c.b16 %v514, %v512
    %v717 = vpack.c.b16 %v515, %v513
    %v718 = vpack.c.b16 %v518, %v516
    %v719 = vpack.c.b16 %v519, %v517
    %v720 = vpack.c.b16 %v522, %v520
    %v721 = vpack.c.b16 %v523, %v521
    %v722 = vpack.c.b16 %v526, %v524
    %v723 = vpack.c.b16 %v527, %v525
    %v724 = vpack.c.b16 %v530, %v528
    %v725 = vpack.c.b16 %v531, %v529
    %v726 = vpack.c.b16 %v534, %v532
    %v727 = vpack.c.b16 %v535, %v533
    %v728 = vpack.c.b16 %v538, %v536
    %v729 = vpack.c.b16 %v539, %v537
    %v730 = vpack.c.b16 %v542, %v540
    %v731 = vpack.c.b16 %v543, %v541
    %v732 = vpack.c.b16 %v546, %v544
    %v733 = vpack.c.b16 %v547, %v545
    %v734 = vpack.c.b16 %v550, %v548
    %v735 = vpack.c.b16 %v551, %v549
    %v736 = vpack.c.b16 %v554, %v552
    %v737 = vpack.c.b16 %v555, %v553
    %v738 = vpack.c.b16 %v558, %v556
    %v739 = vpack.c.b16 %v559, %v557
    %v740 = vpack.c.b16 %v562, %v560
    %v741 = vpack.c.b16 %v563, %v561
    %v742 = vpack.c.b16 %v566, %v564
    %v743 = vpack.c.b16 %v567, %v565
    %v744 = vpack.c.b16 %v570, %v568
    %v745 = vpack.c.b16 %v571, %v569
    %v746 = vpack.c.b16 %v574, %v572
    %v747 = vpack.c.b16 %v575, %v573
    %v748 = vpack.c.b16 %v578, %v576
    %v749 = vpack.c.b16 %v579, %v577
    %v750 = vpack.c.b16 %v582, %v580
    %v751 = vpack.c.b16 %v583, %v581
    %v752 = vpack.c.b16 %v586, %v584
    %v753 = vpack.c.b16 %v587, %v585
    %v754 = vpack.c.b16 %v590, %v588
    %v755 = vpack.c.b16 %v591, %v589
    %v756 = vpack.c.b16 %v594, %v592
    %v757 = vpack.c.b16 %v595, %v593
    %v758 = vpack.c.b16 %v598, %v596
    %v759 = vpack.c.b16 %v599, %v597
    %v760 = vpack.c.b16 %v602, %v600
    %v761 = vpack.c.b16 %v603, %v601
    %v762 = vpack.c.b16 %v606, %v604
    %v763 = vpack.c.b16 %v607, %v605
    %v764 = vpack.c.b16 %v610, %v608
    %v765 = vpack.c.b16 %v611, %v609
    %v766 = vpack.c.b16 %v614, %v612
    %v767 = vpack.c.b16 %v615, %v613
    %v768 = vpack.c.b16 %v618, %v616
    %v769 = vpack.c.b16 %v619, %v617
    %v770 = vpack.c.b16 %v622, %v620
    %v771 = vpack.c.b16 %v623, %v621
    %v772 = vpack.c.b16 %v626, %v624
    %v773 = vpack.c.b16 %v627, %v625
    %v774 = vpack.c.b16 %v630, %v628
    %v775 = vpack.c.b16 %v631, %v629
    %v776 = vpack.c.b16 %v634, %v632
    %v777 = vpack.c.b16 %v635, %v633
    %v778 = vpack.c.b16 %v638, %v636
    %v779 = vpack.c.b16 %v639, %v637
    %v780 = vpack.c.b16 %v642, %v640
    %v781 = vpack.c.b16 %v643, %v641
    %v782 = vpack.c.b16 %v646, %v644
    %v783 = vpack.c.b16 %v647, %v645
    %v784 = vpack.c.b16 %v650, %v648
    %v785 = vpack.c.b16 %v651, %v649
    %v786 = vpack.c.b16 %v654, %v652
    %v787 = vpack.c.b16 %v655, %v653
    %v788 = vpack.c.b16 %v658, %v656
    %v789 = vpack.c.b16 %v659, %v657
    %v790 = vpack.c.b16 %v662, %v660
    %v791 = vpack.c.b16 %v663, %v661
    %920 = vmatpush.bf16.msra.mxu0 %v678
    %921 = vmatpush.bf16.msra.mxu0 %v676
    %922 = vmatpush.bf16.msra.mxu0 %v674
    %923 = vmatpush.bf16.msra.mxu0 %v672
    %924 = vmatpush.bf16.msra.mxu0 %v670
    %925 = vmatpush.bf16.msra.mxu0 %v668
    %926 = vmatpush.bf16.msra.mxu0 %v666
    %927 = vmatpush.bf16.msra.mxu0 %v664
    %928 = vmatmul.bf16.gmra.mxu0 %v266
    %v929 = vpop.f32.mrf.mxu0
    %v930 = vadd.f32 %v276, %v929
    %v931 = vpop.f32.mrf.mxu0
    %932 = vdwg.mxu0
    %933 = vmatpush.bf16.msra.mxu0 %v694
    %934 = vmatpush.bf16.msra.mxu0 %v692
    %935 = vmatpush.bf16.msra.mxu0 %v690
    %936 = vmatpush.bf16.msra.mxu0 %v688
    %937 = vmatpush.bf16.msra.mxu0 %v686
    %938 = vmatpush.bf16.msra.mxu0 %v684
    %939 = vmatpush.bf16.msra.mxu0 %v682
    %940 = vmatpush.bf16.msra.mxu0 %v680
    %941 = vmatmul.bf16.gmra.mxu0 %v267
    %v942 = vpop.f32.mrf.mxu0
    %v943 = vadd.f32 %v930, %v942
    %v944 = vpop.f32.mrf.mxu0
    %945 = vdwg.mxu0
    %946 = vmatpush.bf16.msra.mxu0 %v710
    %947 = vmatpush.bf16.msra.mxu0 %v708
    %948 = vmatpush.bf16.msra.mxu0 %v706
    %949 = vmatpush.bf16.msra.mxu0 %v704
    %950 = vmatpush.bf16.msra.mxu0 %v702
    %951 = vmatpush.bf16.msra.mxu0 %v700
    %952 = vmatpush.bf16.msra.mxu0 %v698
    %953 = vmatpush.bf16.msra.mxu0 %v696
    %954 = vmatmul.bf16.gmra.mxu0 %v268
    %v955 = vpop.f32.mrf.mxu0
    %v956 = vadd.f32 %v943, %v955
    %v957 = vpop.f32.mrf.mxu0
    %958 = vdwg.mxu0
    %959 = vmatpush.bf16.msra.mxu0 %v726
    %960 = vmatpush.bf16.msra.mxu0 %v724
    %961 = vmatpush.bf16.msra.mxu0 %v722
    %962 = vmatpush.bf16.msra.mxu0 %v720
    %963 = vmatpush.bf16.msra.mxu0 %v718
    %964 = vmatpush.bf16.msra.mxu0 %v716
    %965 = vmatpush.bf16.msra.mxu0 %v714
    %966 = vmatpush.bf16.msra.mxu0 %v712
    %967 = vmatmul.bf16.gmra.mxu0 %v269
    %v968 = vpop.f32.mrf.mxu0
    %v969 = vadd.f32 %v956, %v968
    %v970 = vpop.f32.mrf.mxu0
    %971 = vdwg.mxu0
    %972 = vmatpush.bf16.msra.mxu0 %v742
    %973 = vmatpush.bf16.msra.mxu0 %v740
    %974 = vmatpush.bf16.msra.mxu0 %v738
    %975 = vmatpush.bf16.msra.mxu0 %v736
    %976 = vmatpush.bf16.msra.mxu0 %v734
    %977 = vmatpush.bf16.msra.mxu0 %v732
    %978 = vmatpush.bf16.msra.mxu0 %v730
    %979 = vmatpush.bf16.msra.mxu0 %v728
    %980 = vmatmul.bf16.gmra.mxu0 %v270
    %v981 = vpop.f32.mrf.mxu0
    %v982 = vadd.f32 %v969, %v981
    %v983 = vpop.f32.mrf.mxu0
    %984 = vdwg.mxu0
    %985 = vmatpush.bf16.msra.mxu0 %v758
    %986 = vmatpush.bf16.msra.mxu0 %v756
    %987 = vmatpush.bf16.msra.mxu0 %v754
    %988 = vmatpush.bf16.msra.mxu0 %v752
    %989 = vmatpush.bf16.msra.mxu0 %v750
    %990 = vmatpush.bf16.msra.mxu0 %v748
    %991 = vmatpush.bf16.msra.mxu0 %v746
    %992 = vmatpush.bf16.msra.mxu0 %v744
    %993 = vmatmul.bf16.gmra.mxu0 %v271
    %v994 = vpop.f32.mrf.mxu0
    %v995 = vadd.f32 %v982, %v994
    %v996 = vpop.f32.mrf.mxu0
    %997 = vdwg.mxu0
    %998 = vmatpush.bf16.msra.mxu0 %v774
    %999 = vmatpush.bf16.msra.mxu0 %v772
    %1000 = vmatpush.bf16.msra.mxu0 %v770
    %1001 = vmatpush.bf16.msra.mxu0 %v768
    %1002 = vmatpush.bf16.msra.mxu0 %v766
    %1003 = vmatpush.bf16.msra.mxu0 %v764
    %1004 = vmatpush.bf16.msra.mxu0 %v762
    %1005 = vmatpush.bf16.msra.mxu0 %v760
    %1006 = vmatmul.bf16.gmra.mxu0 %v272
    %v1007 = vpop.f32.mrf.mxu0
    %v1008 = vadd.f32 %v995, %v1007
    %v1009 = vpop.f32.mrf.mxu0
    %1010 = vdwg.mxu0
    %1011 = vmatpush.bf16.msra.mxu0 %v790
    %1012 = vmatpush.bf16.msra.mxu0 %v788
    %1013 = vmatpush.bf16.msra.mxu0 %v786
    %1014 = vmatpush.bf16.msra.mxu0 %v784
    %1015 = vmatpush.bf16.msra.mxu0 %v782
    %1016 = vmatpush.bf16.msra.mxu0 %v780
    %1017 = vmatpush.bf16.msra.mxu0 %v778
    %1018 = vmatpush.bf16.msra.mxu0 %v776
    %1019 = vmatmul.bf16.gmra.mxu0 %v273
    %v1020 = vpop.f32.mrf.mxu0
    %v1021 = vadd.f32 %v1008, %v1020
    %v1022 = vpop.f32.mrf.mxu0
    %1023 = vdwg.mxu0
    %1024 = vmatpush.bf16.msra.mxu0 %v679
    %1025 = vmatpush.bf16.msra.mxu0 %v677
    %1026 = vmatpush.bf16.msra.mxu0 %v675
    %1027 = vmatpush.bf16.msra.mxu0 %v673
    %1028 = vmatpush.bf16.msra.mxu0 %v671
    %1029 = vmatpush.bf16.msra.mxu0 %v669
    %1030 = vmatpush.bf16.msra.mxu0 %v667
    %1031 = vmatpush.bf16.msra.mxu0 %v665
    %1032 = vmatmul.bf16.gmra.mxu0 %v266
    %v1033 = vpop.f32.mrf.mxu0
    %v1034 = vadd.f32 %v277, %v1033
    %v1035 = vpop.f32.mrf.mxu0
    %1036 = vdwg.mxu0
    %1037 = vmatpush.bf16.msra.mxu0 %v695
    %1038 = vmatpush.bf16.msra.mxu0 %v693
    %1039 = vmatpush.bf16.msra.mxu0 %v691
    %1040 = vmatpush.bf16.msra.mxu0 %v689
    %1041 = vmatpush.bf16.msra.mxu0 %v687
    %1042 = vmatpush.bf16.msra.mxu0 %v685
    %1043 = vmatpush.bf16.msra.mxu0 %v683
    %1044 = vmatpush.bf16.msra.mxu0 %v681
    %1045 = vmatmul.bf16.gmra.mxu0 %v267
    %v1046 = vpop.f32.mrf.mxu0
    %v1047 = vadd.f32 %v1034, %v1046
    %v1048 = vpop.f32.mrf.mxu0
    %1049 = vdwg.mxu0
    %1050 = vmatpush.bf16.msra.mxu0 %v711
    %1051 = vmatpush.bf16.msra.mxu0 %v709
    %1052 = vmatpush.bf16.msra.mxu0 %v707
    %1053 = vmatpush.bf16.msra.mxu0 %v705
    %1054 = vmatpush.bf16.msra.mxu0 %v703
    %1055 = vmatpush.bf16.msra.mxu0 %v701
    %1056 = vmatpush.bf16.msra.mxu0 %v699
    %1057 = vmatpush.bf16.msra.mxu0 %v697
    %1058 = vmatmul.bf16.gmra.mxu0 %v268
    %v1059 = vpop.f32.mrf.mxu0
    %v1060 = vadd.f32 %v1047, %v1059
    %v1061 = vpop.f32.mrf.mxu0
    %1062 = vdwg.mxu0
    %1063 = vmatpush.bf16.msra.mxu0 %v727
    %1064 = vmatpush.bf16.msra.mxu0 %v725
    %1065 = vmatpush.bf16.msra.mxu0 %v723
    %1066 = vmatpush.bf16.msra.mxu0 %v721
    %1067 = vmatpush.bf16.msra.mxu0 %v719
    %1068 = vmatpush.bf16.msra.mxu0 %v717
    %1069 = vmatpush.bf16.msra.mxu0 %v715
    %1070 = vmatpush.bf16.msra.mxu0 %v713
    %1071 = vmatmul.bf16.gmra.mxu0 %v269
    %v1072 = vpop.f32.mrf.mxu0
    %v1073 = vadd.f32 %v1060, %v1072
    %v1074 = vpop.f32.mrf.mxu0
    %1075 = vdwg.mxu0
    %1076 = vmatpush.bf16.msra.mxu0 %v743
    %1077 = vmatpush.bf16.msra.mxu0 %v741
    %1078 = vmatpush.bf16.msra.mxu0 %v739
    %1079 = vmatpush.bf16.msra.mxu0 %v737
    %1080 = vmatpush.bf16.msra.mxu0 %v735
    %1081 = vmatpush.bf16.msra.mxu0 %v733
    %1082 = vmatpush.bf16.msra.mxu0 %v731
    %1083 = vmatpush.bf16.msra.mxu0 %v729
    %1084 = vmatmul.bf16.gmra.mxu0 %v270
    %v1085 = vpop.f32.mrf.mxu0
    %v1086 = vadd.f32 %v1073, %v1085
    %v1087 = vpop.f32.mrf.mxu0
    %1088 = vdwg.mxu0
    %1089 = vmatpush.bf16.msra.mxu0 %v759
    %1090 = vmatpush.bf16.msra.mxu0 %v757
    %1091 = vmatpush.bf16.msra.mxu0 %v755
    %1092 = vmatpush.bf16.msra.mxu0 %v753
    %1093 = vmatpush.bf16.msra.mxu0 %v751
    %1094 = vmatpush.bf16.msra.mxu0 %v749
    %1095 = vmatpush.bf16.msra.mxu0 %v747
    %1096 = vmatpush.bf16.msra.mxu0 %v745
    %1097 = vmatmul.bf16.gmra.mxu0 %v271
    %v1098 = vpop.f32.mrf.mxu0
    %v1099 = vadd.f32 %v1086, %v1098
    %v1100 = vpop.f32.mrf.mxu0
    %1101 = vdwg.mxu0
    %1102 = vmatpush.bf16.msra.mxu0 %v775
    %1103 = vmatpush.bf16.msra.mxu0 %v773
    %1104 = vmatpush.bf16.msra.mxu0 %v771
    %1105 = vmatpush.bf16.msra.mxu0 %v769
    %1106 = vmatpush.bf16.msra.mxu0 %v767
    %1107 = vmatpush.bf16.msra.mxu0 %v765
    %1108 = vmatpush.bf16.msra.mxu0 %v763
    %1109 = vmatpush.bf16.msra.mxu0 %v761
    %1110 = vmatmul.bf16.gmra.mxu0 %v272
    %v1111 = vpop.f32.mrf.mxu0
    %v1112 = vadd.f32 %v1099, %v1111
    %v1113 = vpop.f32.mrf.mxu0
    %1114 = vdwg.mxu0
    %1115 = vmatpush.bf16.msra.mxu0 %v791
    %1116 = vmatpush.bf16.msra.mxu0 %v789
    %1117 = vmatpush.bf16.msra.mxu0 %v787
    %1118 = vmatpush.bf16.msra.mxu0 %v785
    %1119 = vmatpush.bf16.msra.mxu0 %v783
    %1120 = vmatpush.bf16.msra.mxu0 %v781
    %1121 = vmatpush.bf16.msra.mxu0 %v779
    %1122 = vmatpush.bf16.msra.mxu0 %v777
    %1123 = vmatmul.bf16.gmra.mxu0 %v273
    %v1124 = vpop.f32.mrf.mxu0
    %v1125 = vadd.f32 %v1112, %v1124
    %v1126 = vpop.f32.mrf.mxu0
    %1127 = vdwg.mxu0
    %1129 = vset.pattern.permute.xlu0 0
    %1130 = vperm.xlu0 %1129, %v79
    %v1131 = vpop.permute.xlu0 %1130
    %v1133 = vmul.f32 %v1021, %v1131
    %v1134 = vmul.f32 %v1125, %v1131
    %v1135 = vrot.slane %v1133, 4
    %v1136 = vadd.f32 %v1133, %v1135
    %v1137 = vrot.slane %v1136, 2
    %v1138 = vadd.f32 %v1136, %v1137
    %v1139 = vrot.slane %v1138, 1
    %v1140 = vadd.f32 %v1138, %v1139
    %v1141 = vrot.slane %v1134, 4
    %v1142 = vadd.f32 %v1134, %v1141
    %v1143 = vrot.slane %v1142, 2
    %v1144 = vadd.f32 %v1142, %v1143
    %v1145 = vrot.slane %v1144, 1
    %v1146 = vadd.f32 %v1144, %v1145
    %v1147 = vmul.f32 %v1133, %v1021
    %v1148 = vmul.f32 %v1134, %v1125
    %v1149 = vrot.slane %v1147, 4
    %v1150 = vadd.f32 %v1147, %v1149
    %v1151 = vrot.slane %v1150, 2
    %v1152 = vadd.f32 %v1150, %v1151
    %v1153 = vrot.slane %v1152, 1
    %v1154 = vadd.f32 %v1152, %v1153
    %v1155 = vrot.slane %v1148, 4
    %v1156 = vadd.f32 %v1148, %v1155
    %v1157 = vrot.slane %v1156, 2
    %v1158 = vadd.f32 %v1156, %v1157
    %v1159 = vrot.slane %v1158, 1
    %v1160 = vadd.f32 %v1158, %v1159
    %vm1161 = vcmask 1040384
    %v1162 = vsel %vm1161, %v1140, %v1154
    %v1163 = vsel %vm1161, %v1146, %v1160
    %v1164 = vpack.c.bf16 %v1162, %v1162
    %v1165 = vpack.c.bf16 %v1163, %v1163
    %v1198 = vunpack.c.l.b16 %v80
    %v1199 = vunpack.c.l.b16 %v81
    %v1200 = vunpack.c.l.b16 %v82
    %v1201 = vunpack.c.l.b16 %v83
    %v1202 = vunpack.c.l.b16 %v84
    %v1203 = vunpack.c.l.b16 %v85
    %v1204 = vunpack.c.l.b16 %v86
    %v1205 = vunpack.c.l.b16 %v87
    %v1206 = vunpack.c.l.b16 %v88
    %v1207 = vunpack.c.l.b16 %v89
    %v1208 = vunpack.c.l.b16 %v90
    %v1209 = vunpack.c.l.b16 %v91
    %v1210 = vunpack.c.l.b16 %v92
    %v1211 = vunpack.c.l.b16 %v93
    %v1212 = vunpack.c.l.b16 %v94
    %v1213 = vunpack.c.l.b16 %v95
    %v1214 = vunpack.c.l.b16 %v96
    %v1215 = vunpack.c.l.b16 %v97
    %v1216 = vunpack.c.l.b16 %v98
    %v1217 = vunpack.c.l.b16 %v99
    %v1218 = vunpack.c.l.b16 %v100
    %v1219 = vunpack.c.l.b16 %v101
    %v1220 = vunpack.c.l.b16 %v102
    %v1221 = vunpack.c.l.b16 %v103
    %v1222 = vunpack.c.l.b16 %v104
    %v1223 = vunpack.c.l.b16 %v105
    %v1224 = vunpack.c.l.b16 %v106
    %v1225 = vunpack.c.l.b16 %v107
    %v1226 = vunpack.c.l.b16 %v108
    %v1227 = vunpack.c.l.b16 %v109
    %v1228 = vunpack.c.l.b16 %v110
    %v1229 = vunpack.c.l.b16 %v111
    %v1230 = vpack.c.b16 %v1199, %v1198
    %v1231 = vpack.c.b16 %v1201, %v1200
    %v1232 = vpack.c.b16 %v1203, %v1202
    %v1233 = vpack.c.b16 %v1205, %v1204
    %v1234 = vpack.c.b16 %v1207, %v1206
    %v1235 = vpack.c.b16 %v1209, %v1208
    %v1236 = vpack.c.b16 %v1211, %v1210
    %v1237 = vpack.c.b16 %v1213, %v1212
    %v1238 = vpack.c.b16 %v1215, %v1214
    %v1239 = vpack.c.b16 %v1217, %v1216
    %v1240 = vpack.c.b16 %v1219, %v1218
    %v1241 = vpack.c.b16 %v1221, %v1220
    %v1242 = vpack.c.b16 %v1223, %v1222
    %v1243 = vpack.c.b16 %v1225, %v1224
    %v1244 = vpack.c.b16 %v1227, %v1226
    %v1245 = vpack.c.b16 %v1229, %v1228
    %1262 = vmatpush.bf16.msra.mxu0 %v1237
    %1263 = vmatpush.bf16.msra.mxu0 %v1236
    %1264 = vmatpush.bf16.msra.mxu0 %v1235
    %1265 = vmatpush.bf16.msra.mxu0 %v1234
    %1266 = vmatpush.bf16.msra.mxu0 %v1233
    %1267 = vmatpush.bf16.msra.mxu0 %v1232
    %1268 = vmatpush.bf16.msra.mxu0 %v1231
    %1269 = vmatpush.bf16.msra.mxu0 %v1230
    %1270 = vmatmul.bf16.gmra.mxu0 %v1164
    %v1271 = vpop.f32.mrf.mxu0
    %v1272 = vadd.f32 0.0, %v1271
    %v1273 = vpop.f32.mrf.mxu0
    %1274 = vdwg.mxu0
    %1275 = vmatpush.bf16.msra.mxu0 %v1245
    %1276 = vmatpush.bf16.msra.mxu0 %v1244
    %1277 = vmatpush.bf16.msra.mxu0 %v1243
    %1278 = vmatpush.bf16.msra.mxu0 %v1242
    %1279 = vmatpush.bf16.msra.mxu0 %v1241
    %1280 = vmatpush.bf16.msra.mxu0 %v1240
    %1281 = vmatpush.bf16.msra.mxu0 %v1239
    %1282 = vmatpush.bf16.msra.mxu0 %v1238
    %1283 = vmatmul.bf16.gmra.mxu0 %v1165
    %v1284 = vpop.f32.mrf.mxu0
    %v1285 = vadd.f32 %v1272, %v1284
    %v1286 = vpop.f32.mrf.mxu0
    %1287 = vdwg.mxu0
    %v1288 = vrcp.pop 128.0
    %v1289 = vmul.f32 128.0, %v1288
    %v1290 = vsub.f32 1.0, %v1289
    %v1291 = vmul.f32 %v1288, %v1290
    %v1292 = vadd.f32 %v1288, %v1291
    %vm1293 = vweird.f32 %v1288
    %v1294 = vsel %vm1293, %v1288, %v1292
    %v1295 = vmul.f32 %v1285, %v1294
    %v1296 = vmul.f32 %v1295, %v1295
    %v1298 = vrot.slane %v1296, 7
    %v1300 = vsub.f32 %v1295, %v1298
    %v1301 = vmax.f32 %v1300, 0.0
    %v1302 = vld [vmem:[%s2 + $0x10] ss:$0 sm:$0xff]
    %v1303 = vadd.f32 %v1301, 1e-05
    %v1304 = vrsqrt.pop %v1303
    %v1305 = vmul.f32 %v1304, %v1303
    %v1306 = vmul.f32 %v1305, %v1304
    %v1307 = vmul.f32 0.5, %v1306
    %v1308 = vsub.f32 1.5, %v1307
    %v1309 = vmul.f32 %v1304, %v1308
    %vm1310 = vweird.f32 %v1303
    %vm1311 = vweird.f32 %v1304
    %vm1312 = vmor %vm1310, %vm1311
    %v1313 = vsel %vm1312, %v1304, %v1309
    %v1314 = vmul.f32 %v1302, %v1313
    %v1315 = vld [vmem:[%s2 + $0x20] ss:$0 sm:$0xff]
    %v1317 = vrot.slane %v1314, 1
    %v1319 = vmul.f32 %v1295, %v1317
    %v1320 = vsub.f32 %v1315, %v1319
    %v1322 = vrot.slane %v1320, 7
    %v1324 = vsel %vm1161, %v1317, %v1322
    %v1325 = vpack.c.bf16 %v1324, %v1324
    %v1327 = vunpack.c.l.b16 %v112
    %v1328 = vunpack.c.h.b16 %v112
    %v1329 = vpack.c.b16 %v1327, %v1327
    %v1330 = vpack.c.b16 %v1328, %v1328
    %vm1331 = vcmask 31744
    %v1333 = vsel %vm1331, %v1325, 0
    %vm1335 = vcmask 1041408
    %v1337 = vsel %vm1335, %v1329, 0
    %v1340 = vsel %vm1335, %v1330, 0
    %1342 = vmatpush.bf16.msra.mxu0 0
    %1343 = vmatpush.bf16.msra.mxu0 0
    %1344 = vmatpush.bf16.msra.mxu0 0
    %1345 = vmatpush.bf16.msra.mxu0 0
    %1346 = vmatpush.bf16.msra.mxu0 0
    %1347 = vmatpush.bf16.msra.mxu0 0
    %1348 = vmatpush.bf16.msra.mxu0 0
    %1349 = vmatpush.bf16.msra.mxu0 %v1337
    %1350 = vmatmul.bf16.gmra.mxu0 %v1333
    %v1351 = vpop.f32.mrf.mxu0
    %v1352 = vadd.f32 0.0, %v1351
    %v1353 = vpop.f32.mrf.mxu0
    %1354 = vdwg.mxu0
    %1355 = vmatpush.bf16.msra.mxu0 0
    %1356 = vmatpush.bf16.msra.mxu0 0
    %1357 = vmatpush.bf16.msra.mxu0 0
    %1358 = vmatpush.bf16.msra.mxu0 0
    %1359 = vmatpush.bf16.msra.mxu0 0
    %1360 = vmatpush.bf16.msra.mxu0 0
    %1361 = vmatpush.bf16.msra.mxu0 0
    %1362 = vmatpush.bf16.msra.mxu0 %v1340
    %1363 = vmatmul.bf16.gmra.mxu0 %v1333
    %v1364 = vpop.f32.mrf.mxu0
    %v1365 = vadd.f32 0.0, %v1364
    %v1366 = vpop.f32.mrf.mxu0
    %1367 = vdwg.mxu0
    %v1368 = vperm.slane %v1352, 0
    %v1369 = vperm.slane %v1365, 0
    %v1370 = vmul.f32 %v1021, %v1368
    %v1371 = vmul.f32 %v1125, %v1369
    %v1372 = vperm.slane %v1352, 1
    %v1373 = vperm.slane %v1365, 1
    %v1374 = vadd.f32 %v1370, %v1372
    %v1375 = vadd.f32 %v1371, %v1373
    %v1376 = vld [vmem:[%s1] sm:$0xff]
    %v1377 = vld [vmem:[%s1 + $0x8] sm:$0xff]
    %v1378 = vmul.f32 %v1374, %v1376
    %v1379 = vmul.f32 %v1375, %v1377
    %v1380 = vmax.f32 %v1378, 0.0
    %v1381 = vmax.f32 %v1379, 0.0
    %v1382 = vld [vmem:[#allocation2] sm:$0xf]
    %v1383 = vld [vmem:[#allocation2 + $0x4] sm:$0xf]
    %v1384 = vld [vmem:[#allocation2 + $0x8] sm:$0xf]
    %v1385 = vld [vmem:[#allocation2 + $0xc] sm:$0xf]
    %v1386 = vld [vmem:[#allocation2 + $0x10] sm:$0xf]
    %v1387 = vld [vmem:[#allocation2 + $0x14] sm:$0xf]
    %v1388 = vld [vmem:[#allocation2 + $0x18] sm:$0xf]
    %v1389 = vld [vmem:[#allocation2 + $0x1c] sm:$0xf]
    %v1390 = vld [vmem:[#allocation2 + $0x20] sm:$0xf]
    %v1391 = vld [vmem:[#allocation2 + $0x24] sm:$0xf]
    %v1392 = vld [vmem:[#allocation2 + $0x28] sm:$0xf]
    %v1393 = vld [vmem:[#allocation2 + $0x2c] sm:$0xf]
    %v1394 = vld [vmem:[#allocation2 + $0x30] sm:$0xf]
    %v1395 = vld [vmem:[#allocation2 + $0x34] sm:$0xf]
    %v1396 = vld [vmem:[#allocation2 + $0x38] sm:$0xf]
    %v1397 = vld [vmem:[#allocation2 + $0x3c] sm:$0xf]
    %v1398 = vld [vmem:[#allocation2 + $0x40] sm:$0xf]
    %v1399 = vld [vmem:[#allocation2 + $0x44] sm:$0xf]
    %v1400 = vld [vmem:[#allocation2 + $0x48] sm:$0xf]
    %v1401 = vld [vmem:[#allocation2 + $0x4c] sm:$0xf]
    %v1402 = vld [vmem:[#allocation2 + $0x50] sm:$0xf]
    %v1403 = vld [vmem:[#allocation2 + $0x54] sm:$0xf]
    %v1404 = vld [vmem:[#allocation2 + $0x58] sm:$0xf]
    %v1405 = vld [vmem:[#allocation2 + $0x5c] sm:$0xf]
    %v1406 = vld [vmem:[#allocation2 + $0x60] sm:$0xf]
    %v1407 = vld [vmem:[#allocation2 + $0x64] sm:$0xf]
    %v1408 = vld [vmem:[#allocation2 + $0x68] sm:$0xf]
    %v1409 = vld [vmem:[#allocation2 + $0x6c] sm:$0xf]
    %v1410 = vld [vmem:[#allocation2 + $0x70] sm:$0xf]
    %v1411 = vld [vmem:[#allocation2 + $0x74] sm:$0xf]
    %v1412 = vld [vmem:[#allocation2 + $0x78] sm:$0xf]
    %v1413 = vld [vmem:[#allocation2 + $0x7c] sm:$0xf]
    %v1414 = vpack.c.bf16 %v1380, %v1380
    %v1415 = vpack.c.bf16 %v1381, %v1381
    %v1416 = vld [vmem:[%s2 + $0x30] ss:$0 sm:$0xff]
    %v1449 = vunpack.c.l.b16 %v1382
    %v1450 = vunpack.c.l.b16 %v1383
    %v1451 = vunpack.c.l.b16 %v1384
    %v1452 = vunpack.c.l.b16 %v1385
    %v1453 = vunpack.c.l.b16 %v1386
    %v1454 = vunpack.c.l.b16 %v1387
    %v1455 = vunpack.c.l.b16 %v1388
    %v1456 = vunpack.c.l.b16 %v1389
    %v1457 = vunpack.c.l.b16 %v1390
    %v1458 = vunpack.c.l.b16 %v1391
    %v1459 = vunpack.c.l.b16 %v1392
    %v1460 = vunpack.c.l.b16 %v1393
    %v1461 = vunpack.c.l.b16 %v1394
    %v1462 = vunpack.c.l.b16 %v1395
    %v1463 = vunpack.c.l.b16 %v1396
    %v1464 = vunpack.c.l.b16 %v1397
    %v1465 = vunpack.c.l.b16 %v1398
    %v1466 = vunpack.c.l.b16 %v1399
    %v1467 = vunpack.c.l.b16 %v1400
    %v1468 = vunpack.c.l.b16 %v1401
    %v1469 = vunpack.c.l.b16 %v1402
    %v1470 = vunpack.c.l.b16 %v1403
    %v1471 = vunpack.c.l.b16 %v1404
    %v1472 = vunpack.c.l.b16 %v1405
    %v1473 = vunpack.c.l.b16 %v1406
    %v1474 = vunpack.c.l.b16 %v1407
    %v1475 = vunpack.c.l.b16 %v1408
    %v1476 = vunpack.c.l.b16 %v1409
    %v1477 = vunpack.c.l.b16 %v1410
    %v1478 = vunpack.c.l.b16 %v1411
    %v1479 = vunpack.c.l.b16 %v1412
    %v1480 = vunpack.c.l.b16 %v1413
    %v1481 = vpack.c.b16 %v1450, %v1449
    %v1482 = vpack.c.b16 %v1452, %v1451
    %v1483 = vpack.c.b16 %v1454, %v1453
    %v1484 = vpack.c.b16 %v1456, %v1455
    %v1485 = vpack.c.b16 %v1458, %v1457
    %v1486 = vpack.c.b16 %v1460, %v1459
    %v1487 = vpack.c.b16 %v1462, %v1461
    %v1488 = vpack.c.b16 %v1464, %v1463
    %v1489 = vpack.c.b16 %v1466, %v1465
    %v1490 = vpack.c.b16 %v1468, %v1467
    %v1491 = vpack.c.b16 %v1470, %v1469
    %v1492 = vpack.c.b16 %v1472, %v1471
    %v1493 = vpack.c.b16 %v1474, %v1473
    %v1494 = vpack.c.b16 %v1476, %v1475
    %v1495 = vpack.c.b16 %v1478, %v1477
    %v1496 = vpack.c.b16 %v1480, %v1479
    %1513 = vmatpush.bf16.msra.mxu0 %v1488
    %1514 = vmatpush.bf16.msra.mxu0 %v1487
    %1515 = vmatpush.bf16.msra.mxu0 %v1486
    %1516 = vmatpush.bf16.msra.mxu0 %v1485
    %1517 = vmatpush.bf16.msra.mxu0 %v1484
    %1518 = vmatpush.bf16.msra.mxu0 %v1483
    %1519 = vmatpush.bf16.msra.mxu0 %v1482
    %1520 = vmatpush.bf16.msra.mxu0 %v1481
    %1521 = vmatmul.bf16.gmra.mxu0 %v1414
    %v1522 = vpop.f32.mrf.mxu0
    %v1523 = vadd.f32 %v1416, %v1522
    %v1524 = vpop.f32.mrf.mxu0
    %1525 = vdwg.mxu0
    %1526 = vmatpush.bf16.msra.mxu0 %v1496
    %1527 = vmatpush.bf16.msra.mxu0 %v1495
    %1528 = vmatpush.bf16.msra.mxu0 %v1494
    %1529 = vmatpush.bf16.msra.mxu0 %v1493
    %1530 = vmatpush.bf16.msra.mxu0 %v1492
    %1531 = vmatpush.bf16.msra.mxu0 %v1491
    %1532 = vmatpush.bf16.msra.mxu0 %v1490
    %1533 = vmatpush.bf16.msra.mxu0 %v1489
    %1534 = vmatmul.bf16.gmra.mxu0 %v1415
    %v1535 = vpop.f32.mrf.mxu0
    %v1536 = vadd.f32 %v1523, %v1535
    %v1537 = vpop.f32.mrf.mxu0
    %1538 = vdwg.mxu0
    %v1539 = vmul.f32 %v1536, %v1131
    %v1540 = vrot.slane %v1539, 4
    %v1541 = vadd.f32 %v1539, %v1540
    %v1542 = vrot.slane %v1541, 2
    %v1543 = vadd.f32 %v1541, %v1542
    %v1544 = vrot.slane %v1543, 1
    %v1545 = vadd.f32 %v1543, %v1544
    %v1546 = vmul.f32 %v1539, %v1536
    %v1547 = vrot.slane %v1546, 4
    %v1548 = vadd.f32 %v1546, %v1547
    %v1549 = vrot.slane %v1548, 2
    %v1550 = vadd.f32 %v1548, %v1549
    %v1551 = vrot.slane %v1550, 1
    %v1552 = vadd.f32 %v1550, %v1551
    %v1553 = vsel %vm1161, %v1545, %v1552
    %v1554 = vpack.c.bf16 %v1553, %v1553
    %v1571 = vunpack.c.l.b16 %v113
    %v1572 = vunpack.c.l.b16 %v114
    %v1573 = vunpack.c.l.b16 %v115
    %v1574 = vunpack.c.l.b16 %v116
    %v1575 = vunpack.c.l.b16 %v117
    %v1576 = vunpack.c.l.b16 %v118
    %v1577 = vunpack.c.l.b16 %v119
    %v1578 = vunpack.c.l.b16 %v120
    %v1579 = vunpack.c.l.b16 %v121
    %v1580 = vunpack.c.l.b16 %v122
    %v1581 = vunpack.c.l.b16 %v123
    %v1582 = vunpack.c.l.b16 %v124
    %v1583 = vunpack.c.l.b16 %v125
    %v1584 = vunpack.c.l.b16 %v126
    %v1585 = vunpack.c.l.b16 %v127
    %v1586 = vunpack.c.l.b16 %v128
    %v1587 = vpack.c.b16 %v1572, %v1571
    %v1588 = vpack.c.b16 %v1574, %v1573
    %v1589 = vpack.c.b16 %v1576, %v1575
    %v1590 = vpack.c.b16 %v1578, %v1577
    %v1591 = vpack.c.b16 %v1580, %v1579
    %v1592 = vpack.c.b16 %v1582, %v1581
    %v1593 = vpack.c.b16 %v1584, %v1583
    %v1594 = vpack.c.b16 %v1586, %v1585
    %1603 = vmatpush.bf16.msra.mxu0 %v1594
    %1604 = vmatpush.bf16.msra.mxu0 %v1593
    %1605 = vmatpush.bf16.msra.mxu0 %v1592
    %1606 = vmatpush.bf16.msra.mxu0 %v1591
    %1607 = vmatpush.bf16.msra.mxu0 %v1590
    %1608 = vmatpush.bf16.msra.mxu0 %v1589
    %1609 = vmatpush.bf16.msra.mxu0 %v1588
    %1610 = vmatpush.bf16.msra.mxu0 %v1587
    %1611 = vmatmul.bf16.gmra.mxu0 %v1554
    %v1612 = vpop.f32.mrf.mxu0
    %v1613 = vadd.f32 0.0, %v1612
    %v1614 = vpop.f32.mrf.mxu0
    %1615 = vdwg.mxu0
    %v1616 = vrcp.pop 32.0
    %v1617 = vmul.f32 32.0, %v1616
    %v1618 = vsub.f32 1.0, %v1617
    %v1619 = vmul.f32 %v1616, %v1618
    %v1620 = vadd.f32 %v1616, %v1619
    %vm1621 = vweird.f32 %v1616
    %v1622 = vsel %vm1621, %v1616, %v1620
    %v1623 = vmul.f32 %v1613, %v1622
    %v1624 = vmul.f32 %v1623, %v1623
    %v1626 = vrot.slane %v1624, 7
    %v1628 = vsub.f32 %v1623, %v1626
    %v1629 = vmax.f32 %v1628, 0.0
    %v1630 = vld [vmem:[%s2 + $0x40] ss:$0 sm:$0xff]
    %v1631 = vadd.f32 %v1629, 1e-05
    %v1632 = vrsqrt.pop %v1631
    %v1633 = vmul.f32 %v1632, %v1631
    %v1634 = vmul.f32 %v1633, %v1632
    %v1635 = vmul.f32 0.5, %v1634
    %v1636 = vsub.f32 1.5, %v1635
    %v1637 = vmul.f32 %v1632, %v1636
    %vm1638 = vweird.f32 %v1631
    %vm1639 = vweird.f32 %v1632
    %vm1640 = vmor %vm1638, %vm1639
    %v1641 = vsel %vm1640, %v1632, %v1637
    %v1642 = vmul.f32 %v1630, %v1641
    %v1643 = vld [vmem:[%s2 + $0x50] ss:$0 sm:$0xff]
    %v1645 = vrot.slane %v1642, 1
    %v1647 = vmul.f32 %v1623, %v1645
    %v1648 = vsub.f32 %v1643, %v1647
    %v1650 = vrot.slane %v1648, 7
    %v1652 = vsel %vm1161, %v1645, %v1650
    %v1653 = vpack.c.bf16 %v1652, %v1652
    %vm1654 = vcmask 64512
    %v1656 = vsel %vm1654, %v1653, 0
    %vm1658 = vcmask 1043456
    %v1660 = vsel %vm1658, %v129, 0
    %1662 = vmatpush.bf16.msra.mxu0 0
    %1663 = vmatpush.bf16.msra.mxu0 0
    %1664 = vmatpush.bf16.msra.mxu0 0
    %1665 = vmatpush.bf16.msra.mxu0 0
    %1666 = vmatpush.bf16.msra.mxu0 0
    %1667 = vmatpush.bf16.msra.mxu0 0
    %1668 = vmatpush.bf16.msra.mxu0 0
    %1669 = vmatpush.bf16.msra.mxu0 %v1660
    %1670 = vmatmul.bf16.gmra.mxu0 %v1656
    %v1671 = vpop.f32.mrf.mxu0
    %v1672 = vadd.f32 0.0, %v1671
    %v1673 = vpop.f32.mrf.mxu0
    %1674 = vdwg.mxu0
    %v1675 = vperm.slane %v1672, 0
    %v1676 = vmul.f32 %v1536, %v1675
    %v1677 = vperm.slane %v1672, 1
    %v1678 = vadd.f32 %v1676, %v1677
    %v1679 = vld [vmem:[%s1 + $0x10] sm:$0xff]
    %v1680 = vmul.f32 %v1678, %v1679
    %v1681 = vmax.f32 %v1680, 0.0
    %v1682 = vld [vmem:[#allocation6] sm:$0xf]
    %v1683 = vld [vmem:[#allocation6 + $0x8] sm:$0xf]
    %v1684 = vld [vmem:[#allocation6 + $0x10] sm:$0xf]
    %v1685 = vld [vmem:[#allocation6 + $0x18] sm:$0xf]
    %v1686 = vld [vmem:[#allocation6 + $0x20] sm:$0xf]
    %v1687 = vld [vmem:[#allocation6 + $0x28] sm:$0xf]
    %v1688 = vld [vmem:[#allocation6 + $0x30] sm:$0xf]
    %v1689 = vld [vmem:[#allocation6 + $0x38] sm:$0xf]
    %v1690 = vld [vmem:[#allocation6 + $0x40] sm:$0xf]
    %v1691 = vld [vmem:[#allocation6 + $0x48] sm:$0xf]
    %v1692 = vld [vmem:[#allocation6 + $0x50] sm:$0xf]
    %v1693 = vld [vmem:[#allocation6 + $0x58] sm:$0xf]
    %v1694 = vld [vmem:[#allocation6 + $0x60] sm:$0xf]
    %v1695 = vld [vmem:[#allocation6 + $0x68] sm:$0xf]
    %v1696 = vld [vmem:[#allocation6 + $0x70] sm:$0xf]
    %v1697 = vld [vmem:[#allocation6 + $0x78] sm:$0xf]
    %v1698 = vpack.c.bf16 %v1681, %v1681
    %v1699 = vld [vmem:[%s2 + $0x60] ss:$0 sm:$0xff]
    %v1716 = vunpack.c.l.b16 %v1682
    %v1717 = vunpack.c.l.b16 %v1683
    %v1718 = vunpack.c.l.b16 %v1684
    %v1719 = vunpack.c.l.b16 %v1685
    %v1720 = vunpack.c.l.b16 %v1686
    %v1721 = vunpack.c.l.b16 %v1687
    %v1722 = vunpack.c.l.b16 %v1688
    %v1723 = vunpack.c.l.b16 %v1689
    %v1724 = vunpack.c.l.b16 %v1690
    %v1725 = vunpack.c.l.b16 %v1691
    %v1726 = vunpack.c.l.b16 %v1692
    %v1727 = vunpack.c.l.b16 %v1693
    %v1728 = vunpack.c.l.b16 %v1694
    %v1729 = vunpack.c.l.b16 %v1695
    %v1730 = vunpack.c.l.b16 %v1696
    %v1731 = vunpack.c.l.b16 %v1697
    %v1732 = vpack.c.b16 %v1717, %v1716
    %v1733 = vpack.c.b16 %v1719, %v1718
    %v1734 = vpack.c.b16 %v1721, %v1720
    %v1735 = vpack.c.b16 %v1723, %v1722
    %v1736 = vpack.c.b16 %v1725, %v1724
    %v1737 = vpack.c.b16 %v1727, %v1726
    %v1738 = vpack.c.b16 %v1729, %v1728
    %v1739 = vpack.c.b16 %v1731, %v1730
    %1748 = vmatpush.bf16.msra.mxu0 %v1739
    %1749 = vmatpush.bf16.msra.mxu0 %v1738
    %1750 = vmatpush.bf16.msra.mxu0 %v1737
    %1751 = vmatpush.bf16.msra.mxu0 %v1736
    %1752 = vmatpush.bf16.msra.mxu0 %v1735
    %1753 = vmatpush.bf16.msra.mxu0 %v1734
    %1754 = vmatpush.bf16.msra.mxu0 %v1733
    %1755 = vmatpush.bf16.msra.mxu0 %v1732
    %1756 = vmatmul.bf16.gmra.mxu0 %v1698
    %v1757 = vpop.f32.mrf.mxu0
    %v1758 = vadd.f32 %v1699, %v1757
    %v1759 = vpop.f32.mrf.mxu0
    %1760 = vdwg.mxu0
    %v1761 = vld [vmem:[%s1 + $0x28] sm:$0xff]
    %v1762 = vmul.f32 %v1758, 0.5
    %v1763 = vmul.f32 %v1762, 1.442695
    %v1764 = vpow.pop %v1763
    %1766 = vrot.lane.b32.xlu0 %v1764, 120
    %v1767 = vpop.permute.xlu0 %1766
    %v1769 = vmul.f32 %v1761, %v1767
    %v1770 = vadd.f32 %v1758, %v1769
    %v1771 = vld [vmem:[#allocation6 + $0x80] sm:$0xf]
    %v1772 = vpack.c.bf16 %v1770, %v1770
    %v1773 = vld [vmem:[%s2 + $0x70] ss:$0 sm:$0xff]
    %v1775 = vsel %vm1654, %v1772, 0
    %v1778 = vsel %vm1658, %v1771, 0
    %1780 = vmatpush.bf16.msra.mxu0 0
    %1781 = vmatpush.bf16.msra.mxu0 0
    %1782 = vmatpush.bf16.msra.mxu0 0
    %1783 = vmatpush.bf16.msra.mxu0 0
    %1784 = vmatpush.bf16.msra.mxu0 0
    %1785 = vmatpush.bf16.msra.mxu0 0
    %1786 = vmatpush.bf16.msra.mxu0 0
    %1787 = vmatpush.bf16.msra.mxu0 %v1778
    %1788 = vmatmul.bf16.gmra.mxu0 %v1775
    %v1789 = vpop.f32.mrf.mxu0
    %v1790 = vadd.f32 %v1773, %v1789
    %v1791 = vpop.f32.mrf.mxu0
    %1792 = vdwg.mxu0
    %v1793 = vmax.f32 %v1790, 0.0
    %v1794 = vld [vmem:[#allocation4] sm:$0xff]
    %v1795 = vld [vmem:[#allocation4 + $0x8] sm:$0xff]
    %v1796 = vld [vmem:[#allocation4 + $0x10] sm:$0xff]
    %v1797 = vld [vmem:[#allocation4 + $0x18] sm:$0xff]
    %v1798 = vld [vmem:[#allocation4 + $0x20] sm:$0xff]
    %v1799 = vld [vmem:[#allocation4 + $0x28] sm:$0xff]
    %v1800 = vld [vmem:[#allocation4 + $0x30] sm:$0xff]
    %v1801 = vld [vmem:[#allocation4 + $0x38] sm:$0xff]
    %v1802 = vld [vmem:[#allocation4 + $0x40] sm:$0xff]
    %v1803 = vld [vmem:[#allocation4 + $0x48] sm:$0xff]
    %v1804 = vld [vmem:[#allocation4 + $0x50] sm:$0xff]
    %v1805 = vld [vmem:[#allocation4 + $0x58] sm:$0xff]
    %v1806 = vld [vmem:[#allocation4 + $0x60] sm:$0xff]
    %v1807 = vld [vmem:[#allocation4 + $0x68] sm:$0xff]
    %v1808 = vld [vmem:[#allocation4 + $0x70] sm:$0xff]
    %v1809 = vld [vmem:[#allocation4 + $0x78] sm:$0xff]
    %v1810 = vpack.c.bf16 %v1793, %v1793
    %s1811 = scalar_lea.vmem %s2, 128
    %v1812 = vld [vmem:[%s1811] ss:$8 sm:$0x3]
    %v1814 = vperm.slane %v1812, 0
    %v1815 = vperm.slane %v1812, 1
    %v1834 = vunpack.c.l.b16 %v1794
    %v1835 = vunpack.c.h.b16 %v1794
    %v1836 = vunpack.c.l.b16 %v1795
    %v1837 = vunpack.c.h.b16 %v1795
    %v1838 = vunpack.c.l.b16 %v1796
    %v1839 = vunpack.c.h.b16 %v1796
    %v1840 = vunpack.c.l.b16 %v1797
    %v1841 = vunpack.c.h.b16 %v1797
    %v1842 = vunpack.c.l.b16 %v1798
    %v1843 = vunpack.c.h.b16 %v1798
    %v1844 = vunpack.c.l.b16 %v1799
    %v1845 = vunpack.c.h.b16 %v1799
    %v1846 = vunpack.c.l.b16 %v1800
    %v1847 = vunpack.c.h.b16 %v1800
    %v1848 = vunpack.c.l.b16 %v1801
    %v1849 = vunpack.c.h.b16 %v1801
    %v1850 = vunpack.c.l.b16 %v1802
    %v1851 = vunpack.c.h.b16 %v1802
    %v1852 = vunpack.c.l.b16 %v1803
    %v1853 = vunpack.c.h.b16 %v1803
    %v1854 = vunpack.c.l.b16 %v1804
    %v1855 = vunpack.c.h.b16 %v1804
    %v1856 = vunpack.c.l.b16 %v1805
    %v1857 = vunpack.c.h.b16 %v1805
    %v1858 = vunpack.c.l.b16 %v1806
    %v1859 = vunpack.c.h.b16 %v1806
    %v1860 = vunpack.c.l.b16 %v1807
    %v1861 = vunpack.c.h.b16 %v1807
    %v1862 = vunpack.c.l.b16 %v1808
    %v1863 = vunpack.c.h.b16 %v1808
    %v1864 = vunpack.c.l.b16 %v1809
    %v1865 = vunpack.c.h.b16 %v1809
    %v1866 = vpack.c.b16 %v1836, %v1834
    %v1867 = vpack.c.b16 %v1837, %v1835
    %v1868 = vpack.c.b16 %v1840, %v1838
    %v1869 = vpack.c.b16 %v1841, %v1839
    %v1870 = vpack.c.b16 %v1844, %v1842
    %v1871 = vpack.c.b16 %v1845, %v1843
    %v1872 = vpack.c.b16 %v1848, %v1846
    %v1873 = vpack.c.b16 %v1849, %v1847
    %v1874 = vpack.c.b16 %v1852, %v1850
    %v1875 = vpack.c.b16 %v1853, %v1851
    %v1876 = vpack.c.b16 %v1856, %v1854
    %v1877 = vpack.c.b16 %v1857, %v1855
    %v1878 = vpack.c.b16 %v1860, %v1858
    %v1879 = vpack.c.b16 %v1861, %v1859
    %v1880 = vpack.c.b16 %v1864, %v1862
    %v1881 = vpack.c.b16 %v1865, %v1863
    %1898 = vmatpush.bf16.msra.mxu0 %v1880
    %1899 = vmatpush.bf16.msra.mxu0 %v1878
    %1900 = vmatpush.bf16.msra.mxu0 %v1876
    %1901 = vmatpush.bf16.msra.mxu0 %v1874
    %1902 = vmatpush.bf16.msra.mxu0 %v1872
    %1903 = vmatpush.bf16.msra.mxu0 %v1870
    %1904 = vmatpush.bf16.msra.mxu0 %v1868
    %1905 = vmatpush.bf16.msra.mxu0 %v1866
    %1906 = vmatmul.bf16.gmra.mxu0 %v1810
    %v1907 = vpop.f32.mrf.mxu0
    %v1908 = vadd.f32 %v1814, %v1907
    %v1909 = vpop.f32.mrf.mxu0
    %1910 = vdwg.mxu0
    %1911 = vmatpush.bf16.msra.mxu0 %v1881
    %1912 = vmatpush.bf16.msra.mxu0 %v1879
    %1913 = vmatpush.bf16.msra.mxu0 %v1877
    %1914 = vmatpush.bf16.msra.mxu0 %v1875
    %1915 = vmatpush.bf16.msra.mxu0 %v1873
    %1916 = vmatpush.bf16.msra.mxu0 %v1871
    %1917 = vmatpush.bf16.msra.mxu0 %v1869
    %1918 = vmatpush.bf16.msra.mxu0 %v1867
    %1919 = vmatmul.bf16.gmra.mxu0 %v1810
    %v1920 = vpop.f32.mrf.mxu0
    %v1921 = vadd.f32 %v1815, %v1920
    %v1922 = vpop.f32.mrf.mxu0
    %1923 = vdwg.mxu0
    %v1924 = vmul.f32 %v1908, %v1131
    %v1925 = vmul.f32 %v1921, %v1131
    %v1926 = vrot.slane %v1924, 4
    %v1927 = vadd.f32 %v1924, %v1926
    %v1928 = vrot.slane %v1927, 2
    %v1929 = vadd.f32 %v1927, %v1928
    %v1930 = vrot.slane %v1929, 1
    %v1931 = vadd.f32 %v1929, %v1930
    %v1932 = vrot.slane %v1925, 4
    %v1933 = vadd.f32 %v1925, %v1932
    %v1934 = vrot.slane %v1933, 2
    %v1935 = vadd.f32 %v1933, %v1934
    %v1936 = vrot.slane %v1935, 1
    %v1937 = vadd.f32 %v1935, %v1936
    %v1938 = vmul.f32 %v1924, %v1908
    %v1939 = vmul.f32 %v1925, %v1921
    %v1940 = vrot.slane %v1938, 4
    %v1941 = vadd.f32 %v1938, %v1940
    %v1942 = vrot.slane %v1941, 2
    %v1943 = vadd.f32 %v1941, %v1942
    %v1944 = vrot.slane %v1943, 1
    %v1945 = vadd.f32 %v1943, %v1944
    %v1946 = vrot.slane %v1939, 4
    %v1947 = vadd.f32 %v1939, %v1946
    %v1948 = vrot.slane %v1947, 2
    %v1949 = vadd.f32 %v1947, %v1948
    %v1950 = vrot.slane %v1949, 1
    %v1951 = vadd.f32 %v1949, %v1950
    %v1952 = vsel %vm1161, %v1931, %v1945
    %v1953 = vsel %vm1161, %v1937, %v1951
    %v1954 = vpack.c.bf16 %v1952, %v1952
    %v1955 = vpack.c.bf16 %v1953, %v1953
    %1956 = vmatpush.bf16.msra.mxu0 %v1237
    %1957 = vmatpush.bf16.msra.mxu0 %v1236
    %1958 = vmatpush.bf16.msra.mxu0 %v1235
    %1959 = vmatpush.bf16.msra.mxu0 %v1234
    %1960 = vmatpush.bf16.msra.mxu0 %v1233
    %1961 = vmatpush.bf16.msra.mxu0 %v1232
    %1962 = vmatpush.bf16.msra.mxu0 %v1231
    %1963 = vmatpush.bf16.msra.mxu0 %v1230
    %1964 = vmatmul.bf16.gmra.mxu0 %v1954
    %v1965 = vpop.f32.mrf.mxu0
    %v1966 = vadd.f32 0.0, %v1965
    %v1967 = vpop.f32.mrf.mxu0
    %1968 = vdwg.mxu0
    %1969 = vmatpush.bf16.msra.mxu0 %v1245
    %1970 = vmatpush.bf16.msra.mxu0 %v1244
    %1971 = vmatpush.bf16.msra.mxu0 %v1243
    %1972 = vmatpush.bf16.msra.mxu0 %v1242
    %1973 = vmatpush.bf16.msra.mxu0 %v1241
    %1974 = vmatpush.bf16.msra.mxu0 %v1240
    %1975 = vmatpush.bf16.msra.mxu0 %v1239
    %1976 = vmatpush.bf16.msra.mxu0 %v1238
    %1977 = vmatmul.bf16.gmra.mxu0 %v1955
    %v1978 = vpop.f32.mrf.mxu0
    %v1979 = vadd.f32 %v1966, %v1978
    %v1980 = vpop.f32.mrf.mxu0
    %1981 = vdwg.mxu0
    %v1982 = vmul.f32 %v1979, %v1294
    %v1983 = vmul.f32 %v1982, %v1982
    %v1985 = vrot.slane %v1983, 7
    %v1987 = vsub.f32 %v1982, %v1985
    %v1988 = vmax.f32 %v1987, 0.0
    %v1989 = vld [vmem:[%s2 + $0x90] ss:$0 sm:$0xff]
    %v1990 = vadd.f32 %v1988, 1e-05
    %v1991 = vrsqrt.pop %v1990
    %v1992 = vmul.f32 %v1991, %v1990
    %v1993 = vmul.f32 %v1992, %v1991
    %v1994 = vmul.f32 0.5, %v1993
    %v1995 = vsub.f32 1.5, %v1994
    %v1996 = vmul.f32 %v1991, %v1995
    %vm1997 = vweird.f32 %v1990
    %vm1998 = vweird.f32 %v1991
    %vm1999 = vmor %vm1997, %vm1998
    %v2000 = vsel %vm1999, %v1991, %v1996
    %v2001 = vmul.f32 %v1989, %v2000
    %v2002 = vld [vmem:[%s2 + $0xa0] ss:$0 sm:$0xff]
    %v2004 = vrot.slane %v2001, 1
    %v2006 = vmul.f32 %v1982, %v2004
    %v2007 = vsub.f32 %v2002, %v2006
    %v2009 = vrot.slane %v2007, 7
    %v2011 = vsel %vm1161, %v2004, %v2009
    %v2012 = vpack.c.bf16 %v2011, %v2011
    %v2014 = vsel %vm1331, %v2012, 0
    %2016 = vmatpush.bf16.msra.mxu0 0
    %2017 = vmatpush.bf16.msra.mxu0 0
    %2018 = vmatpush.bf16.msra.mxu0 0
    %2019 = vmatpush.bf16.msra.mxu0 0
    %2020 = vmatpush.bf16.msra.mxu0 0
    %2021 = vmatpush.bf16.msra.mxu0 0
    %2022 = vmatpush.bf16.msra.mxu0 0
    %2023 = vmatpush.bf16.msra.mxu0 %v1337
    %2024 = vmatmul.bf16.gmra.mxu0 %v2014
    %v2025 = vpop.f32.mrf.mxu0
    %v2026 = vadd.f32 0.0, %v2025
    %v2027 = vpop.f32.mrf.mxu0
    %2028 = vdwg.mxu0
    %2029 = vmatpush.bf16.msra.mxu0 0
    %2030 = vmatpush.bf16.msra.mxu0 0
    %2031 = vmatpush.bf16.msra.mxu0 0
    %2032 = vmatpush.bf16.msra.mxu0 0
    %2033 = vmatpush.bf16.msra.mxu0 0
    %2034 = vmatpush.bf16.msra.mxu0 0
    %2035 = vmatpush.bf16.msra.mxu0 0
    %2036 = vmatpush.bf16.msra.mxu0 %v1340
    %2037 = vmatmul.bf16.gmra.mxu0 %v2014
    %v2038 = vpop.f32.mrf.mxu0
    %v2039 = vadd.f32 0.0, %v2038
    %v2040 = vpop.f32.mrf.mxu0
    %2041 = vdwg.mxu0
    %v2042 = vperm.slane %v2026, 0
    %v2043 = vperm.slane %v2039, 0
    %v2044 = vmul.f32 %v1908, %v2042
    %v2045 = vmul.f32 %v1921, %v2043
    %v2046 = vperm.slane %v2026, 1
    %v2047 = vperm.slane %v2039, 1
    %v2048 = vadd.f32 %v2044, %v2046
    %v2049 = vadd.f32 %v2045, %v2047
    %v2050 = vld [vmem:[%s1 + $0x18] sm:$0xff]
    %v2051 = vld [vmem:[%s1 + $0x20] sm:$0xff]
    %v2052 = vmul.f32 %v2048, %v2050
    %v2053 = vmul.f32 %v2049, %v2051
    %v2054 = vmax.f32 %v2052, 0.0
    %v2055 = vmax.f32 %v2053, 0.0
    %v2056 = vld [vmem:[%s6] sm:$0xff]
    %v2057 = vld [vmem:[%s6 + $0x8] sm:$0xff]
    %v2058 = vld [vmem:[%s6 + $0x10] sm:$0xff]
    %v2059 = vld [vmem:[%s6 + $0x18] sm:$0xff]
    %v2060 = vld [vmem:[%s6 + $0x20] sm:$0xff]
    %v2061 = vld [vmem:[%s6 + $0x28] sm:$0xff]
    %v2062 = vld [vmem:[%s6 + $0x30] sm:$0xff]
    %v2063 = vld [vmem:[%s6 + $0x38] sm:$0xff]
    %v2064 = vld [vmem:[%s6 + $0x40] sm:$0xff]
    %v2065 = vld [vmem:[%s6 + $0x48] sm:$0xff]
    %v2066 = vld [vmem:[%s6 + $0x50] sm:$0xff]
    %v2067 = vld [vmem:[%s6 + $0x58] sm:$0xff]
    %v2068 = vld [vmem:[%s6 + $0x60] sm:$0xff]
    %v2069 = vld [vmem:[%s6 + $0x68] sm:$0xff]
    %v2070 = vld [vmem:[%s6 + $0x70] sm:$0xff]
    %v2071 = vld [vmem:[%s6 + $0x78] sm:$0xff]
    %v2072 = vld [vmem:[%s6 + $0x80] sm:$0xff]
    %v2073 = vld [vmem:[%s6 + $0x88] sm:$0xff]
    %v2074 = vld [vmem:[%s6 + $0x90] sm:$0xff]
    %v2075 = vld [vmem:[%s6 + $0x98] sm:$0xff]
    %v2076 = vld [vmem:[%s6 + $0xa0] sm:$0xff]
    %v2077 = vld [vmem:[%s6 + $0xa8] sm:$0xff]
    %v2078 = vld [vmem:[%s6 + $0xb0] sm:$0xff]
    %v2079 = vld [vmem:[%s6 + $0xb8] sm:$0xff]
    %v2080 = vld [vmem:[%s6 + $0xc0] sm:$0xff]
    %v2081 = vld [vmem:[%s6 + $0xc8] sm:$0xff]
    %v2082 = vld [vmem:[%s6 + $0xd0] sm:$0xff]
    %v2083 = vld [vmem:[%s6 + $0xd8] sm:$0xff]
    %v2084 = vld [vmem:[%s6 + $0xe0] sm:$0xff]
    %v2085 = vld [vmem:[%s6 + $0xe8] sm:$0xff]
    %v2086 = vld [vmem:[%s6 + $0xf0] sm:$0xff]
    %v2087 = vld [vmem:[%s6 + $0xf8] sm:$0xff]
    %v2088 = vpack.c.bf16 %v2054, %v2054
    %v2089 = vpack.c.bf16 %v2055, %v2055
    %s2090 = scalar_lea.vmem %s2, 176
    %v2091 = vld [vmem:[%s2090] ss:$8 sm:$0x3]
    %v2093 = vperm.slane %v2091, 0
    %v2094 = vperm.slane %v2091, 1
    %v2129 = vunpack.c.l.b16 %v2056
    %v2130 = vunpack.c.h.b16 %v2056
    %v2131 = vunpack.c.l.b16 %v2057
    %v2132 = vunpack.c.h.b16 %v2057
    %v2133 = vunpack.c.l.b16 %v2058
    %v2134 = vunpack.c.h.b16 %v2058
    %v2135 = vunpack.c.l.b16 %v2059
    %v2136 = vunpack.c.h.b16 %v2059
    %v2137 = vunpack.c.l.b16 %v2060
    %v2138 = vunpack.c.h.b16 %v2060
    %v2139 = vunpack.c.l.b16 %v2061
    %v2140 = vunpack.c.h.b16 %v2061
    %v2141 = vunpack.c.l.b16 %v2062
    %v2142 = vunpack.c.h.b16 %v2062
    %v2143 = vunpack.c.l.b16 %v2063
    %v2144 = vunpack.c.h.b16 %v2063
    %v2145 = vunpack.c.l.b16 %v2064
    %v2146 = vunpack.c.h.b16 %v2064
    %v2147 = vunpack.c.l.b16 %v2065
    %v2148 = vunpack.c.h.b16 %v2065
    %v2149 = vunpack.c.l.b16 %v2066
    %v2150 = vunpack.c.h.b16 %v2066
    %v2151 = vunpack.c.l.b16 %v2067
    %v2152 = vunpack.c.h.b16 %v2067
    %v2153 = vunpack.c.l.b16 %v2068
    %v2154 = vunpack.c.h.b16 %v2068
    %v2155 = vunpack.c.l.b16 %v2069
    %v2156 = vunpack.c.h.b16 %v2069
    %v2157 = vunpack.c.l.b16 %v2070
    %v2158 = vunpack.c.h.b16 %v2070
    %v2159 = vunpack.c.l.b16 %v2071
    %v2160 = vunpack.c.h.b16 %v2071
    %v2161 = vunpack.c.l.b16 %v2072
    %v2162 = vunpack.c.h.b16 %v2072
    %v2163 = vunpack.c.l.b16 %v2073
    %v2164 = vunpack.c.h.b16 %v2073
    %v2165 = vunpack.c.l.b16 %v2074
    %v2166 = vunpack.c.h.b16 %v2074
    %v2167 = vunpack.c.l.b16 %v2075
    %v2168 = vunpack.c.h.b16 %v2075
    %v2169 = vunpack.c.l.b16 %v2076
    %v2170 = vunpack.c.h.b16 %v2076
    %v2171 = vunpack.c.l.b16 %v2077
    %v2172 = vunpack.c.h.b16 %v2077
    %v2173 = vunpack.c.l.b16 %v2078
    %v2174 = vunpack.c.h.b16 %v2078
    %v2175 = vunpack.c.l.b16 %v2079
    %v2176 = vunpack.c.h.b16 %v2079
    %v2177 = vunpack.c.l.b16 %v2080
    %v2178 = vunpack.c.h.b16 %v2080
    %v2179 = vunpack.c.l.b16 %v2081
    %v2180 = vunpack.c.h.b16 %v2081
    %v2181 = vunpack.c.l.b16 %v2082
    %v2182 = vunpack.c.h.b16 %v2082
    %v2183 = vunpack.c.l.b16 %v2083
    %v2184 = vunpack.c.h.b16 %v2083
    %v2185 = vunpack.c.l.b16 %v2084
    %v2186 = vunpack.c.h.b16 %v2084
    %v2187 = vunpack.c.l.b16 %v2085
    %v2188 = vunpack.c.h.b16 %v2085
    %v2189 = vunpack.c.l.b16 %v2086
    %v2190 = vunpack.c.h.b16 %v2086
    %v2191 = vunpack.c.l.b16 %v2087
    %v2192 = vunpack.c.h.b16 %v2087
    %v2193 = vpack.c.b16 %v2131, %v2129
    %v2194 = vpack.c.b16 %v2132, %v2130
    %v2195 = vpack.c.b16 %v2135, %v2133
    %v2196 = vpack.c.b16 %v2136, %v2134
    %v2197 = vpack.c.b16 %v2139, %v2137
    %v2198 = vpack.c.b16 %v2140, %v2138
    %v2199 = vpack.c.b16 %v2143, %v2141
    %v2200 = vpack.c.b16 %v2144, %v2142
    %v2201 = vpack.c.b16 %v2147, %v2145
    %v2202 = vpack.c.b16 %v2148, %v2146
    %v2203 = vpack.c.b16 %v2151, %v2149
    %v2204 = vpack.c.b16 %v2152, %v2150
    %v2205 = vpack.c.b16 %v2155, %v2153
    %v2206 = vpack.c.b16 %v2156, %v2154
    %v2207 = vpack.c.b16 %v2159, %v2157
    %v2208 = vpack.c.b16 %v2160, %v2158
    %v2209 = vpack.c.b16 %v2163, %v2161
    %v2210 = vpack.c.b16 %v2164, %v2162
    %v2211 = vpack.c.b16 %v2167, %v2165
    %v2212 = vpack.c.b16 %v2168, %v2166
    %v2213 = vpack.c.b16 %v2171, %v2169
    %v2214 = vpack.c.b16 %v2172, %v2170
    %v2215 = vpack.c.b16 %v2175, %v2173
    %v2216 = vpack.c.b16 %v2176, %v2174
    %v2217 = vpack.c.b16 %v2179, %v2177
    %v2218 = vpack.c.b16 %v2180, %v2178
    %v2219 = vpack.c.b16 %v2183, %v2181
    %v2220 = vpack.c.b16 %v2184, %v2182
    %v2221 = vpack.c.b16 %v2187, %v2185
    %v2222 = vpack.c.b16 %v2188, %v2186
    %v2223 = vpack.c.b16 %v2191, %v2189
    %v2224 = vpack.c.b16 %v2192, %v2190
    %2257 = vmatpush.bf16.msra.mxu0 %v2207
    %2258 = vmatpush.bf16.msra.mxu0 %v2205
    %2259 = vmatpush.bf16.msra.mxu0 %v2203
    %2260 = vmatpush.bf16.msra.mxu0 %v2201
    %2261 = vmatpush.bf16.msra.mxu0 %v2199
    %2262 = vmatpush.bf16.msra.mxu0 %v2197
    %2263 = vmatpush.bf16.msra.mxu0 %v2195
    %2264 = vmatpush.bf16.msra.mxu0 %v2193
    %2265 = vmatmul.bf16.gmra.mxu0 %v2088
    %v2266 = vpop.f32.mrf.mxu0
    %v2267 = vadd.f32 %v2093, %v2266
    %v2268 = vpop.f32.mrf.mxu0
    %2269 = vdwg.mxu0
    %2270 = vmatpush.bf16.msra.mxu0 %v2223
    %2271 = vmatpush.bf16.msra.mxu0 %v2221
    %2272 = vmatpush.bf16.msra.mxu0 %v2219
    %2273 = vmatpush.bf16.msra.mxu0 %v2217
    %2274 = vmatpush.bf16.msra.mxu0 %v2215
    %2275 = vmatpush.bf16.msra.mxu0 %v2213
    %2276 = vmatpush.bf16.msra.mxu0 %v2211
    %2277 = vmatpush.bf16.msra.mxu0 %v2209
    %2278 = vmatmul.bf16.gmra.mxu0 %v2089
    %v2279 = vpop.f32.mrf.mxu0
    %v2280 = vadd.f32 %v2267, %v2279
    %v2281 = vpop.f32.mrf.mxu0
    %2282 = vdwg.mxu0
    %2283 = vmatpush.bf16.msra.mxu0 %v2208
    %2284 = vmatpush.bf16.msra.mxu0 %v2206
    %2285 = vmatpush.bf16.msra.mxu0 %v2204
    %2286 = vmatpush.bf16.msra.mxu0 %v2202
    %2287 = vmatpush.bf16.msra.mxu0 %v2200
    %2288 = vmatpush.bf16.msra.mxu0 %v2198
    %2289 = vmatpush.bf16.msra.mxu0 %v2196
    %2290 = vmatpush.bf16.msra.mxu0 %v2194
    %2291 = vmatmul.bf16.gmra.mxu0 %v2088
    %v2292 = vpop.f32.mrf.mxu0
    %v2293 = vadd.f32 %v2094, %v2292
    %v2294 = vpop.f32.mrf.mxu0
    %2295 = vdwg.mxu0
    %2296 = vmatpush.bf16.msra.mxu0 %v2224
    %2297 = vmatpush.bf16.msra.mxu0 %v2222
    %2298 = vmatpush.bf16.msra.mxu0 %v2220
    %2299 = vmatpush.bf16.msra.mxu0 %v2218
    %2300 = vmatpush.bf16.msra.mxu0 %v2216
    %2301 = vmatpush.bf16.msra.mxu0 %v2214
    %2302 = vmatpush.bf16.msra.mxu0 %v2212
    %2303 = vmatpush.bf16.msra.mxu0 %v2210
    %2304 = vmatmul.bf16.gmra.mxu0 %v2089
    %v2305 = vpop.f32.mrf.mxu0
    %v2306 = vadd.f32 %v2293, %v2305
    %v2307 = vpop.f32.mrf.mxu0
    %2308 = vdwg.mxu0
    %v2309 = vxor.u32 %v2280, 2147483648
    %v2310 = vxor.u32 %v2306, 2147483648
    %v2311 = vmul.f32 %v2309, 1.442695
    %v2312 = vpow.pop %v2311
    %v2313 = vmul.f32 %v2310, 1.442695
    %v2314 = vpow.pop %v2313
    %v2315 = vadd.f32 %v2312, 1.0
    %v2316 = vadd.f32 %v2314, 1.0
    %v2317 = vrcp.pop %v2315
    %v2318 = vmul.f32 %v2315, %v2317
    %v2319 = vsub.f32 1.0, %v2318
    %v2320 = vmul.f32 %v2317, %v2319
    %v2321 = vadd.f32 %v2317, %v2320
    %vm2322 = vweird.f32 %v2315
    %vm2323 = vweird.f32 %v2317
    %vm2324 = vmor %vm2322, %vm2323
    %v2325 = vsel %vm2324, %v2317, %v2321
    %v2326 = vand.u32 2147483647, %v2315
    %vm2327 = vcmp.eq.f32.partialorder %v2326, 8.507059e+37
    %v2328 = vand.u32 %v2315, 2147483648
    %v2329 = vor.u32 1.1754944e-38, %v2328
    %v2330 = vsel %vm2327, %v2329, %v2325
    %v2331 = vmul.f32 1.0, %v2330
    %v2332 = vrcp.pop %v2316
    %v2333 = vmul.f32 %v2316, %v2332
    %v2334 = vsub.f32 1.0, %v2333
    %v2335 = vmul.f32 %v2332, %v2334
    %v2336 = vadd.f32 %v2332, %v2335
    %vm2337 = vweird.f32 %v2316
    %vm2338 = vweird.f32 %v2332
    %vm2339 = vmor %vm2337, %vm2338
    %v2340 = vsel %vm2339, %v2332, %v2336
    %v2341 = vand.u32 2147483647, %v2316
    %vm2342 = vcmp.eq.f32.partialorder %v2341, 8.507059e+37
    %v2343 = vand.u32 %v2316, 2147483648
    %v2344 = vor.u32 1.1754944e-38, %v2343
    %v2345 = vsel %vm2342, %v2344, %v2340
    %v2346 = vmul.f32 1.0, %v2345
    %2347 = vst [vmem:[%s8] sm:$0xff] %v2331
    %2348 = vst [vmem:[%s8 + $0x8] sm:$0xff] %v2346
    %v2349 = vld [vmem:[#allocation6 + $0x90] sm:$0xf]
    %v2350 = vld [vmem:[%s2 + $0xc0] ss:$0 sm:$0xff]
    %v2352 = vsel %vm1658, %v2349, 0
    %2354 = vmatpush.bf16.msra.mxu0 0
    %2355 = vmatpush.bf16.msra.mxu0 0
    %2356 = vmatpush.bf16.msra.mxu0 0
    %2357 = vmatpush.bf16.msra.mxu0 0
    %2358 = vmatpush.bf16.msra.mxu0 0
    %2359 = vmatpush.bf16.msra.mxu0 0
    %2360 = vmatpush.bf16.msra.mxu0 0
    %2361 = vmatpush.bf16.msra.mxu0 %v2352
    %2362 = vmatmul.bf16.gmra.mxu0 %v1775
    %v2363 = vpop.f32.mrf.mxu0
    %v2364 = vadd.f32 %v2350, %v2363
    %v2365 = vpop.f32.mrf.mxu0
    %2366 = vdwg.mxu0
    %v2367 = vmul.f32 %v2364, %v1131
    %v2368 = vrot.slane %v2367, 4
    %v2369 = vadd.f32 %v2367, %v2368
    %v2370 = vrot.slane %v2369, 2
    %v2371 = vadd.f32 %v2369, %v2370
    %v2372 = vrot.slane %v2371, 1
    %v2373 = vadd.f32 %v2371, %v2372
    %v2374 = vrcp.pop 2.0
    %v2375 = vmul.f32 2.0, %v2374
    %v2376 = vsub.f32 1.0, %v2375
    %v2377 = vmul.f32 %v2374, %v2376
    %v2378 = vadd.f32 %v2374, %v2377
    %vm2379 = vweird.f32 %v2374
    %v2380 = vsel %vm2379, %v2374, %v2378
    %v2381 = vmul.f32 %v2373, %v2380
    %v2382 = vmul.f32 %v2367, %v2364
    %v2383 = vrot.slane %v2382, 4
    %v2384 = vadd.f32 %v2382, %v2383
    %v2385 = vrot.slane %v2384, 2
    %v2386 = vadd.f32 %v2384, %v2385
    %v2387 = vrot.slane %v2386, 1
    %v2388 = vadd.f32 %v2386, %v2387
    %v2389 = vmul.f32 %v2388, %v2380
    %v2390 = vmul.f32 %v2381, %v2381
    %v2391 = vsub.f32 %v2389, %v2390
    %v2392 = vmax.f32 %v2391, 0.0
    %v2393 = vld [vmem:[%s2 + $0xd0] ss:$0 sm:$0xff]
    %v2394 = vadd.f32 %v2392, 1e-05
    %v2395 = vrsqrt.pop %v2394
    %v2396 = vmul.f32 %v2395, %v2394
    %v2397 = vmul.f32 %v2396, %v2395
    %v2398 = vmul.f32 0.5, %v2397
    %v2399 = vsub.f32 1.5, %v2398
    %v2400 = vmul.f32 %v2395, %v2399
    %vm2401 = vweird.f32 %v2394
    %vm2402 = vweird.f32 %v2395
    %vm2403 = vmor %vm2401, %vm2402
    %v2404 = vsel %vm2403, %v2395, %v2400
    %v2405 = vmul.f32 %v2393, %v2404
    %v2406 = vmul.f32 %v2364, %v2405
    %v2407 = vld [vmem:[%s2 + $0xe0] ss:$0 sm:$0xff]
    %v2408 = vmul.f32 %v2381, %v2405
    %v2409 = vsub.f32 %v2407, %v2408
    %v2410 = vadd.f32 %v2406, %v2409
    %v2411 = vmax.f32 %v2410, 0.0
    %v2412 = vld [vmem:[#allocation6 + $0xa0] sm:$0xf]
    %v2413 = vld [vmem:[#allocation6 + $0xa8] sm:$0xf]
    %v2414 = vld [vmem:[#allocation6 + $0xb0] sm:$0xf]
    %v2415 = vld [vmem:[#allocation6 + $0xb8] sm:$0xf]
    %v2416 = vld [vmem:[#allocation6 + $0xc0] sm:$0xf]
    %v2417 = vld [vmem:[#allocation6 + $0xc8] sm:$0xf]
    %v2418 = vld [vmem:[#allocation6 + $0xd0] sm:$0xf]
    %v2419 = vld [vmem:[#allocation6 + $0xd8] sm:$0xf]
    %v2420 = vld [vmem:[#allocation6 + $0xe0] sm:$0xf]
    %v2421 = vld [vmem:[#allocation6 + $0xe8] sm:$0xf]
    %v2422 = vld [vmem:[#allocation6 + $0xf0] sm:$0xf]
    %v2423 = vld [vmem:[#allocation6 + $0xf8] sm:$0xf]
    %v2424 = vld [vmem:[#allocation6 + $0x100] sm:$0xf]
    %v2425 = vld [vmem:[#allocation6 + $0x108] sm:$0xf]
    %v2426 = vld [vmem:[#allocation6 + $0x110] sm:$0xf]
    %v2427 = vld [vmem:[#allocation6 + $0x118] sm:$0xf]
    %v2428 = vpack.c.bf16 %v2411, %v2411
    %v2429 = vld [vmem:[%s2 + $0xf0] ss:$0 sm:$0xff]
    %v2446 = vunpack.c.l.b16 %v2412
    %v2447 = vunpack.c.l.b16 %v2413
    %v2448 = vunpack.c.l.b16 %v2414
    %v2449 = vunpack.c.l.b16 %v2415
    %v2450 = vunpack.c.l.b16 %v2416
    %v2451 = vunpack.c.l.b16 %v2417
    %v2452 = vunpack.c.l.b16 %v2418
    %v2453 = vunpack.c.l.b16 %v2419
    %v2454 = vunpack.c.l.b16 %v2420
    %v2455 = vunpack.c.l.b16 %v2421
    %v2456 = vunpack.c.l.b16 %v2422
    %v2457 = vunpack.c.l.b16 %v2423
    %v2458 = vunpack.c.l.b16 %v2424
    %v2459 = vunpack.c.l.b16 %v2425
    %v2460 = vunpack.c.l.b16 %v2426
    %v2461 = vunpack.c.l.b16 %v2427
    %v2462 = vpack.c.b16 %v2447, %v2446
    %v2463 = vpack.c.b16 %v2449, %v2448
    %v2464 = vpack.c.b16 %v2451, %v2450
    %v2465 = vpack.c.b16 %v2453, %v2452
    %v2466 = vpack.c.b16 %v2455, %v2454
    %v2467 = vpack.c.b16 %v2457, %v2456
    %v2468 = vpack.c.b16 %v2459, %v2458
    %v2469 = vpack.c.b16 %v2461, %v2460
    %2478 = vmatpush.bf16.msra.mxu0 %v2469
    %2479 = vmatpush.bf16.msra.mxu0 %v2468
    %2480 = vmatpush.bf16.msra.mxu0 %v2467
    %2481 = vmatpush.bf16.msra.mxu0 %v2466
    %2482 = vmatpush.bf16.msra.mxu0 %v2465
    %2483 = vmatpush.bf16.msra.mxu0 %v2464
    %2484 = vmatpush.bf16.msra.mxu0 %v2463
    %2485 = vmatpush.bf16.msra.mxu0 %v2462
    %2486 = vmatmul.bf16.gmra.mxu0 %v2428
    %v2487 = vpop.f32.mrf.mxu0
    %v2488 = vadd.f32 %v2429, %v2487
    %v2489 = vpop.f32.mrf.mxu0
    %2490 = vdwg.mxu0
    %v2491 = vmul.f32 %v2488, %v1131
    %vm2492 = vcmask 523264
    %v2493 = vsel %vm2492, %v2491, 0.0
    %v2494 = vrot.slane %v2493, 4
    %v2495 = vadd.f32 %v2493, %v2494
    %v2496 = vrot.slane %v2495, 2
    %v2497 = vadd.f32 %v2495, %v2496
    %v2498 = vrot.slane %v2497, 1
    %v2499 = vadd.f32 %v2497, %v2498
    %v2500 = vmul.f32 %v2499, %v2380
    %v2501 = vmul.f32 %v2491, %v2488
    %v2502 = vsel %vm2492, %v2501, 0.0
    %v2503 = vrot.slane %v2502, 4
    %v2504 = vadd.f32 %v2502, %v2503
    %v2505 = vrot.slane %v2504, 2
    %v2506 = vadd.f32 %v2504, %v2505
    %v2507 = vrot.slane %v2506, 1
    %v2508 = vadd.f32 %v2506, %v2507
    %v2509 = vmul.f32 %v2508, %v2380
    %v2510 = vmul.f32 %v2500, %v2500
    %v2511 = vsub.f32 %v2509, %v2510
    %v2512 = vmax.f32 %v2511, 0.0
    %v2513 = vld [vmem:[%s2 + $0x100] ss:$0 sm:$0xff]
    %v2514 = vadd.f32 %v2512, 1e-05
    %v2515 = vrsqrt.pop %v2514
    %v2516 = vmul.f32 %v2515, %v2514
    %v2517 = vmul.f32 %v2516, %v2515
    %v2518 = vmul.f32 0.5, %v2517
    %v2519 = vsub.f32 1.5, %v2518
    %v2520 = vmul.f32 %v2515, %v2519
    %vm2521 = vweird.f32 %v2514
    %vm2522 = vweird.f32 %v2515
    %vm2523 = vmor %vm2521, %vm2522
    %v2524 = vsel %vm2523, %v2515, %v2520
    %v2525 = vmul.f32 %v2513, %v2524
    %v2526 = vmul.f32 %v2488, %v2525
    %v2527 = vld [vmem:[%s2 + $0x110] ss:$0 sm:$0xff]
    %v2528 = vmul.f32 %v2500, %v2525
    %v2529 = vsub.f32 %v2527, %v2528
    %v2530 = vadd.f32 %v2526, %v2529
    %v2531 = vmax.f32 %v2530, 0.0
    %v2532 = vld [vmem:[#allocation6 + $0x120] sm:$0xf]
    %v2533 = vld [vmem:[#allocation6 + $0x128] sm:$0xf]
    %v2534 = vld [vmem:[#allocation6 + $0x130] sm:$0xf]
    %v2535 = vld [vmem:[#allocation6 + $0x138] sm:$0xf]
    %v2536 = vld [vmem:[#allocation6 + $0x140] sm:$0xf]
    %v2537 = vld [vmem:[#allocation6 + $0x148] sm:$0xf]
    %v2538 = vld [vmem:[#allocation6 + $0x150] sm:$0xf]
    %v2539 = vld [vmem:[#allocation6 + $0x158] sm:$0xf]
    %v2540 = vpack.c.bf16 %v2531, %v2531
    %v2541 = vld [vmem:[%s2 + $0x120] ss:$0 sm:$0xff]
    %v2550 = vunpack.c.l.b16 %v2532
    %v2551 = vunpack.c.l.b16 %v2533
    %v2552 = vunpack.c.l.b16 %v2534
    %v2553 = vunpack.c.l.b16 %v2535
    %v2554 = vunpack.c.l.b16 %v2536
    %v2555 = vunpack.c.l.b16 %v2537
    %v2556 = vunpack.c.l.b16 %v2538
    %v2557 = vunpack.c.l.b16 %v2539
    %v2558 = vpack.c.b16 %v2551, %v2550
    %v2559 = vpack.c.b16 %v2553, %v2552
    %v2560 = vpack.c.b16 %v2555, %v2554
    %v2561 = vpack.c.b16 %v2557, %v2556
    %v2567 = vsel %vm2492, %v2540, 0
    %2569 = vmatpush.bf16.msra.mxu0 0
    %2570 = vmatpush.bf16.msra.mxu0 0
    %2571 = vmatpush.bf16.msra.mxu0 0
    %2572 = vmatpush.bf16.msra.mxu0 0
    %2573 = vmatpush.bf16.msra.mxu0 %v2561
    %2574 = vmatpush.bf16.msra.mxu0 %v2560
    %2575 = vmatpush.bf16.msra.mxu0 %v2559
    %2576 = vmatpush.bf16.msra.mxu0 %v2558
    %2577 = vmatmul.bf16.gmra.mxu0 %v2567
    %v2578 = vpop.f32.mrf.mxu0
    %v2579 = vadd.f32 %v2541, %v2578
    %v2580 = vpop.f32.mrf.mxu0
    %2581 = vdwg.mxu0
    %v2582 = vxor.u32 %v2579, 2147483648
    %v2583 = vmul.f32 %v2582, 1.442695
    %v2584 = vpow.pop %v2583
    %v2585 = vadd.f32 %v2584, 1.0
    %v2586 = vrcp.pop %v2585
    %v2587 = vmul.f32 %v2585, %v2586
    %v2588 = vsub.f32 1.0, %v2587
    %v2589 = vmul.f32 %v2586, %v2588
    %v2590 = vadd.f32 %v2586, %v2589
    %vm2591 = vweird.f32 %v2585
    %vm2592 = vweird.f32 %v2586
    %vm2593 = vmor %vm2591, %vm2592
    %v2594 = vsel %vm2593, %v2586, %v2590
    %v2595 = vand.u32 2147483647, %v2585
    %vm2596 = vcmp.eq.f32.partialorder %v2595, 8.507059e+37
    %v2597 = vand.u32 %v2585, 2147483648
    %v2598 = vor.u32 1.1754944e-38, %v2597
    %v2599 = vsel %vm2596, %v2598, %v2594
    %v2600 = vmul.f32 1.0, %v2599
    %2602 = vrot.lane.b32.xlu0 %v2600, 16
    %v2603 = vpop.permute.xlu0 %2602
    %vm2605 = vcmask 130048
    %v2606 = vsel %vm2605, %v1758, %v2603
    %2607 = vst [vmem:[%s9] sm:$0xff] %v2606
    // Predicated region
    $region46: #{fwd.1} parent=1 // pred_check
      _
    $region47: #{fwd.1} parent=1 // pred_check_branch
      %2609 = sbr.rel (0) target = $region49
    $region48: #{fwd.1} parent=1 // pred_region
      _
    $region49: #{fwd.1} parent=1 // pred_fallthru
      _
    // Predicated region
    $region50: #{fwd.1} parent=1 // pred_check
      _
    $region51: #{fwd.1} parent=1 // pred_check_branch
      %2611 = sbr.rel (0) target = $region53
    $region52: #{fwd.1} parent=1 // pred_region
      _
    $region53: #{fwd.1} parent=1 // pred_fallthru
      _
    // Predicated region
    $region54: #{fwd.1} parent=1 // pred_check
      _
    $region55: #{fwd.1} parent=1 // pred_check_branch
      %2613 = sbr.rel (0) target = $region57
    $region56: #{fwd.1} parent=1 // pred_region
      _
    $region57: #{fwd.1} parent=1 // pred_fallthru
      _
    // Predicated region
    $region58: #{fwd.1} parent=1 // pred_check
      _
    $region59: #{fwd.1} parent=1 // pred_check_branch
      %2615 = sbr.rel (0) target = $region61
    $region60: #{fwd.1} parent=1 // pred_region
      _
    $region61: #{fwd.1} parent=1 // pred_fallthru
      _
    %2616 = vsyncpa [#allocation3], 1
    %2617 = vsyncpa [#allocation5], 1

</llo_original>
